<compile_context>
chip_gen: v6e
topology: v6e:2x2x1
jax: 0.10.0
libtpu: 0.0.40
codegen_flags: <defaults>
</compile_context>

<pallas_src>
import numpy as np
import jax
import jax.numpy as jnp
from jax.experimental import pallas as pl
from jax.experimental.pallas import tpu as pltpu


# --------------------------------------------------------------------------- #
# Host-side helpers (all cheap setup hoisted out of the kernel)
# --------------------------------------------------------------------------- #
def _bilinear_matrix(n_in, n_out):
    """(n_out, n_in) matrix M with y = M @ x == 1-D bilinear interpolation,
    matching PyTorch's align_corners=True convention.  Rows sum to 1."""
    m = np.zeros((n_out, n_in), dtype=np.float32)
    if n_out == 1 or n_in == 1:
        m[:, 0] = 1.0
        return m
    scale = (n_in - 1) / (n_out - 1)
    for i in range(n_out):
        src = i * scale
        j0 = min(int(np.floor(src)), n_in - 1)
        j1 = min(j0 + 1, n_in - 1)
        frac = src - j0
        m[i, j0] += 1.0 - frac
        m[i, j1] += frac
    return m


def _vmem_capacity_bytes():
    """Physical VMEM per TensorCore; conservative 64 MiB (v7x) fallback."""
    cap = 64 * 1024 * 1024
    try:
        info = pltpu.get_tpu_info()
        for name in ("vmem_capacity_bytes", "vmem_size_bytes", "vmem_bytes"):
            v = getattr(info, name, None)
            if v:
                cap = int(v)
                break
    except Exception:
        pass
    return cap


def _plan_tiles(B, C_in, C_out, H, W, Ho, Wo, x_itemsize, o_itemsize):
    """Pick the output-channel tile (co_t) from a per-generation VMEM budget and
    a matching vmem_limit_bytes for the compiler."""
    cap = _vmem_capacity_bytes()
    budget = int(cap * 0.4)          # ~25 MiB on v7x, ~51 MiB on v5e/v6e
    hw = H * W

    fixed = (2 * C_in * hw * x_itemsize          # x block (double-buffered)
             + 2 * (Ho * H + W * Wo) * 4)        # resident interpolation matrices

    def per_step(t):
        return (2 * t * (C_in + 1) * 4           # weight + bias blocks
                + 2 * t * Ho * Wo * o_itemsize   # output block (double-buffered)
                + t * hw * 4                     # relayout scratch
                + 2 * t * (hw + Ho * H + Ho * W + W * Wo + Ho * Wo) * 4)  # live temps

    # Sublane constraint on the (co_t, C_in) weight block: co_t == C_out or co_t % 8 == 0.
    cands = sorted({d for d in range(1, C_out + 1)
                    if C_out % d == 0 and (d == C_out or d % 8 == 0)},
                   reverse=True)
    fitting = [d for d in cands if fixed + per_step(d) <= budget]
    co_t = max(fitting) if fitting else min(cands)
    # Keep at least 2 grid steps when possible so both v7x TensorCores get work.
    if B * (C_out // co_t) < 2:
        smaller = [d for d in fitting if B * (C_out // d) >= 2]
        if smaller:
            co_t = max(smaller)

    est = fixed + per_step(co_t)
    vmem_limit = int(min(cap, max(2 * est, 32 * 1024 * 1024)))
    return co_t, vmem_limit


# --------------------------------------------------------------------------- #
# Fused forward
# --------------------------------------------------------------------------- #
def updown_block2d_forward(x, w, b, mode, enabled=True,
                           use_bf16_operands=False, out_dtype=jnp.float32):
    """Pallas forward of UpDownBlock2d.

    x: (B, C_in, H, W) NCHW, any float dtype.
    w: (C_out, C_in) or (C_out, C_in, 1, 1) Conv2d(kernel_size=1) weight.
    b: (C_out,) bias.
    Returns (B, C_out, H', W') in float32 (the module applies .float() before each block).
    """
    assert mode in ("up", "down")
    B, C_in, H, W = x.shape
    C_out = b.shape[0]
    hw = H * W

    if enabled:
        Ho, Wo = (2 * H, 2 * W) if mode == "up" else (H // 2, W // 2)
    else:
        Ho, Wo = H, W

    # Interpolation matrices (identity when disabled).
    a_h = jnp.asarray(_bilinear_matrix(H, Ho))        # (Ho, H)
    a_wt = jnp.asarray(_bilinear_matrix(W, Wo).T)     # (W, Wo)

    w2 = jnp.asarray(w).reshape(C_out, C_in).astype(jnp.float32)
    b2 = jnp.asarray(b).reshape(C_out, 1).astype(jnp.float32)
    x_flat = x.reshape(B, C_in, hw)                   # metadata-only reshape

    out_dtype = jnp.dtype(out_dtype)
    co_t, vmem_limit = _plan_tiles(B, C_in, C_out, H, W, Ho, Wo,
                                   x.dtype.itemsize, out_dtype.itemsize)
    n_co = C_out // co_t
    cdt = jnp.bfloat16 if use_bf16_operands else jnp.float32

    def kernel(w_ref, b_ref, ah_ref, awt_ref, x_ref, o_ref, y3_ref):
        # w: (co_t, C_in)  b: (co_t, 1)  ah: (Ho, H)  awt: (W, Wo)
        # x: (C_in, H*W)   o: (co_t, Ho, Wo)   y3_ref: (co_t, H, W) f32 scratch
        xv = x_ref[...].astype(cdt)
        wv = w_ref[...].astype(cdt)
        # 1x1 conv = channel-mixing matmul over the flattened (lane-dense) spatial axis.
        y = jnp.dot(wv, xv, preferred_element_type=jnp.float32) + b_ref[...]  # (co_t, hw)
        # Portable in-VMEM relayout (co_t, H*W) -> (co_t, H, W): static slice + store
        # per row (avoids relying on Mosaic lane-splitting reshapes).
        for h in range(H):
            y3_ref[:, h, :] = y[:, h * W:(h + 1) * W]
        y3 = y3_ref[...].astype(cdt)                                          # (co_t, H, W)
        # Separable bilinear resize as two batched matmuls over the channel tile
        # (no kron block-diagonal blow-up: exactly minimal FLOPs).
        ah_b = jnp.broadcast_to(ah_ref[...].astype(cdt), (co_t, Ho, H))
        t = jnp.einsum("cyh,chw->cyw", ah_b, y3,
                       preferred_element_type=jnp.float32)                    # (co_t, Ho, W)
        awt_b = jnp.broadcast_to(awt_ref[...].astype(cdt), (co_t, W, Wo))
        r = jnp.einsum("cyw,cwv->cyv", t.astype(cdt), awt_b,
                       preferred_element_type=jnp.float32)                    # (co_t, Ho, Wo)
        o_ref[...] = r.astype(o_ref.dtype)

    cost = pl.CostEstimate(
        flops=int(2 * B * C_out * C_in * hw            # conv
                  + 2 * B * C_out * Ho * H * W         # H resize
                  + 2 * B * C_out * Ho * W * Wo),      # W resize
        transcendentals=0,
        bytes_accessed=int(B * C_in * hw * x.dtype.itemsize
                           + B * C_out * Ho * Wo * out_dtype.itemsize
                           + (C_out * C_in + C_out + Ho * H + W * Wo) * 4),
    )

    out = pl.pallas_call(
        kernel,
        out_shape=jax.ShapeDtypeStruct((B, C_out, Ho, Wo), out_dtype),
        grid_spec=pltpu.PrefetchScalarGridSpec(
            num_scalar_prefetch=0,
            grid=(B, n_co),
            in_specs=[
                pl.BlockSpec((co_t, C_in), lambda bi, ci: (ci, 0)),
                pl.BlockSpec((co_t, 1), lambda bi, ci: (ci, 0)),
                pl.BlockSpec((Ho, H), lambda bi, ci: (0, 0)),
                pl.BlockSpec((W, Wo), lambda bi, ci: (0, 0)),
                # x block index ignores the channel-tile axis -> stays VMEM-resident
                # across all co steps of a batch element (no re-fetch).
                pl.BlockSpec((None, C_in, hw), lambda bi, ci: (bi, 0, 0)),
            ],
            out_specs=pl.BlockSpec((None, co_t, Ho, Wo),
                                   lambda bi, ci: (bi, ci, 0, 0)),
            scratch_shapes=[pltpu.VMEM((co_t, H, W), jnp.float32)],
        ),
        compiler_params=pltpu.CompilerParams(
            dimension_semantics=("parallel", "parallel"),
            vmem_limit_bytes=vmem_limit),
        cost_estimate=cost,
    )(w2, b2, a_h, a_wt, x_flat)
    return out


# --------------------------------------------------------------------------- #
# Pure-JAX reference (mirrors the PyTorch module literally)
# --------------------------------------------------------------------------- #
def _ref_bilinear_axis(v, n_out, axis):
    n_in = v.shape[axis]
    scale = 0.0 if (n_out == 1 or n_in == 1) else (n_in - 1) / (n_out - 1)
    src = np.arange(n_out, dtype=np.float64) * scale
    j0 = np.clip(np.floor(src).astype(np.int32), 0, n_in - 1)
    j1 = np.clip(j0 + 1, 0, n_in - 1)
    frac = (src - j0).astype(np.float32)
    x0 = jnp.take(v, jnp.asarray(j0), axis=axis)
    x1 = jnp.take(v, jnp.asarray(j1), axis=axis)
    shape = [1] * v.ndim
    shape[axis] = n_out
    frac = jnp.asarray(frac).reshape(shape)
    return x0 * (1.0 - frac) + x1 * frac


def reference_forward(x, w, b, mode, enabled=True):
    x = x.astype(jnp.float32)

    def conv(v):
        return (jnp.einsum("oc,bchw->bohw", w.reshape(w.shape[0], -1), v,
                           precision=jax.lax.Precision.HIGHEST)
                + b[None, :, None, None])

    def interp(v):
        if not enabled:
            return v
        _, _, h, wd = v.shape
        h2, w2 = (2 * h, 2 * wd) if mode == "up" else (h // 2, wd // 2)
        v = _ref_bilinear_axis(v, h2, axis=2)
        v = _ref_bilinear_axis(v, w2, axis=3)
        return v

    if mode == "up":
        return conv(interp(x))
    return interp(conv(x))


# --------------------------------------------------------------------------- #
# main
# --------------------------------------------------------------------------- #
if __name__ == "__main__":
    B, C_in, C_out, H, W = 2, 4, 8, 16, 16

    key = jax.random.PRNGKey(0)
    k_x, k_w, k_b = jax.random.split(key, 3)
    x = jax.random.normal(k_x, (B, C_in, H, W), dtype=jnp.float32)
    # Conv2d(c_in, c_out, kernel_size=1) weight (1x1 kernel squeezed) and bias.
    w = jax.random.normal(k_w, (C_out, C_in), dtype=jnp.float32) * 0.3
    b = jax.random.normal(k_b, (C_out,), dtype=jnp.float32) * 0.1

    for mode in ("up", "down"):
        out = jax.block_until_ready(updown_block2d_forward(x, w, b, mode))
        ref = jax.block_until_ready(reference_forward(x, w, b, mode))
        # 'up' commutes conv/resize inside the fused kernel -> f32-rounding-level diffs only.
        np.testing.assert_allclose(np.asarray(out), np.asarray(ref),
                                   rtol=1e-4, atol=1e-4)

    print("KERNEL_OK")
</pallas_src>

<mosaic_0001>
module attributes {stable_mosaic.version = 11 : i64} {
  func.func @kernel(%arg0: i32, %arg1: i32, %arg2: memref<8x4xf32, #tpu.memory_space<vmem>>, %arg3: memref<8x1xf32, #tpu.memory_space<vmem>>, %arg4: memref<32x16xf32, #tpu.memory_space<vmem>>, %arg5: memref<16x32xf32, #tpu.memory_space<vmem>>, %arg6: memref<1x4x256xf32, #tpu.memory_space<vmem>>, %arg7: memref<1x8x32x32xf32, #tpu.memory_space<vmem>>, %arg8: memref<8x16x16xf32, #tpu.memory_space<vmem>>) attributes {dimension_semantics = [#tpu.dimension_semantics<parallel>, #tpu.dimension_semantics<parallel>], iteration_bounds = array<i64: 2, 1>, scalar_prefetch = 0 : i64, scratch_operands = 1 : i64, tpu.core_type = #tpu.core_type<tc>, window_params = [{transform_indices = @transform_0, window_bounds = array<i64: 8, 4>}, {transform_indices = @transform_1, window_bounds = array<i64: 8, 1>}, {pipeline_mode = #tpu.pipeline_mode<synchronous>, transform_indices = @transform_2, window_bounds = array<i64: 32, 16>}, {pipeline_mode = #tpu.pipeline_mode<synchronous>, transform_indices = @transform_3, window_bounds = array<i64: 16, 32>}, {transform_indices = @transform_4, window_bounds = array<i64: 1, 4, 256>}, {transform_indices = @transform_5, window_bounds = array<i64: 1, 8, 32, 32>}]} {
    %c0 = arith.constant 0 : index
    %c0_0 = arith.constant 0 : index
    %c0_1 = arith.constant 0 : index
    %0 = vector.load %arg6[%c0, %c0_0, %c0_1] : memref<1x4x256xf32, #tpu.memory_space<vmem>>, vector<1x4x256xf32>
    %1 = vector.shape_cast %0 : vector<1x4x256xf32> to vector<4x256xf32>
    %c0_2 = arith.constant 0 : index
    %c0_3 = arith.constant 0 : index
    %2 = vector.load %arg2[%c0_2, %c0_3] : memref<8x4xf32, #tpu.memory_space<vmem>>, vector<8x4xf32>
    %cst = arith.constant dense<0.000000e+00> : vector<8x256xf32>
    %3 = tpu.matmul %2, %1, %cst {dimension_numbers = #tpu.dot_dimension_numbers<[1], [0], [0], [1], [0, 0, 1, 1], [], []>} : vector<8x4xf32>, vector<4x256xf32>, vector<8x256xf32> -> vector<8x256xf32>
    %c0_4 = arith.constant 0 : index
    %c0_5 = arith.constant 0 : index
    %4 = vector.load %arg3[%c0_4, %c0_5] : memref<8x1xf32, #tpu.memory_space<vmem>>, vector<8x1xf32>
    %5 = vector.broadcast %4 : vector<8x1xf32> to vector<8x256xf32>
    %6 = arith.addf %3, %5 : vector<8x256xf32>
    %7 = vector.extract_strided_slice %6 {offsets = [0, 0], sizes = [8, 16], strides = [1, 1]} : vector<8x256xf32> to vector<8x16xf32>
    %c0_6 = arith.constant 0 : index
    %c0_7 = arith.constant 0 : index
    %c0_8 = arith.constant 0 : index
    %8 = vector.load %arg8[%c0_6, %c0_7, %c0_8] : memref<8x16x16xf32, #tpu.memory_space<vmem>>, vector<8x1x16xf32>
    %9 = vector.shape_cast %8 : vector<8x1x16xf32> to vector<8x16xf32>
    %10 = vector.shape_cast %7 : vector<8x16xf32> to vector<8x1x16xf32>
    tpu.vector_store %arg8[%c0_6, %c0_7, %c0_8], %10 {strides = array<i32>} : memref<8x16x16xf32, #tpu.memory_space<vmem>>, vector<8x1x16xf32>,
    %11 = vector.extract_strided_slice %6 {offsets = [0, 16], sizes = [8, 16], strides = [1, 1]} : vector<8x256xf32> to vector<8x16xf32>
    %c0_9 = arith.constant 0 : index
    %c1 = arith.constant 1 : index
    %c0_10 = arith.constant 0 : index
    %12 = vector.load %arg8[%c0_9, %c1, %c0_10] : memref<8x16x16xf32, #tpu.memory_space<vmem>>, vector<8x1x16xf32>
    %13 = vector.shape_cast %12 : vector<8x1x16xf32> to vector<8x16xf32>
    %14 = vector.shape_cast %11 : vector<8x16xf32> to vector<8x1x16xf32>
    tpu.vector_store %arg8[%c0_9, %c1, %c0_10], %14 {strides = array<i32>} : memref<8x16x16xf32, #tpu.memory_space<vmem>>, vector<8x1x16xf32>,
    %15 = vector.extract_strided_slice %6 {offsets = [0, 32], sizes = [8, 16], strides = [1, 1]} : vector<8x256xf32> to vector<8x16xf32>
    %c0_11 = arith.constant 0 : index
    %c2 = arith.constant 2 : index
    %c0_12 = arith.constant 0 : index
    %16 = vector.load %arg8[%c0_11, %c2, %c0_12] : memref<8x16x16xf32, #tpu.memory_space<vmem>>, vector<8x1x16xf32>
    %17 = vector.shape_cast %16 : vector<8x1x16xf32> to vector<8x16xf32>
    %18 = vector.shape_cast %15 : vector<8x16xf32> to vector<8x1x16xf32>
    tpu.vector_store %arg8[%c0_11, %c2, %c0_12], %18 {strides = array<i32>} : memref<8x16x16xf32, #tpu.memory_space<vmem>>, vector<8x1x16xf32>,
    %19 = vector.extract_strided_slice %6 {offsets = [0, 48], sizes = [8, 16], strides = [1, 1]} : vector<8x256xf32> to vector<8x16xf32>
    %c0_13 = arith.constant 0 : index
    %c3 = arith.constant 3 : index
    %c0_14 = arith.constant 0 : index
    %20 = vector.load %arg8[%c0_13, %c3, %c0_14] : memref<8x16x16xf32, #tpu.memory_space<vmem>>, vector<8x1x16xf32>
    %21 = vector.shape_cast %20 : vector<8x1x16xf32> to vector<8x16xf32>
    %22 = vector.shape_cast %19 : vector<8x16xf32> to vector<8x1x16xf32>
    tpu.vector_store %arg8[%c0_13, %c3, %c0_14], %22 {strides = array<i32>} : memref<8x16x16xf32, #tpu.memory_space<vmem>>, vector<8x1x16xf32>,
    %23 = vector.extract_strided_slice %6 {offsets = [0, 64], sizes = [8, 16], strides = [1, 1]} : vector<8x256xf32> to vector<8x16xf32>
    %c0_15 = arith.constant 0 : index
    %c4 = arith.constant 4 : index
    %c0_16 = arith.constant 0 : index
    %24 = vector.load %arg8[%c0_15, %c4, %c0_16] : memref<8x16x16xf32, #tpu.memory_space<vmem>>, vector<8x1x16xf32>
    %25 = vector.shape_cast %24 : vector<8x1x16xf32> to vector<8x16xf32>
    %26 = vector.shape_cast %23 : vector<8x16xf32> to vector<8x1x16xf32>
    tpu.vector_store %arg8[%c0_15, %c4, %c0_16], %26 {strides = array<i32>} : memref<8x16x16xf32, #tpu.memory_space<vmem>>, vector<8x1x16xf32>,
    %27 = vector.extract_strided_slice %6 {offsets = [0, 80], sizes = [8, 16], strides = [1, 1]} : vector<8x256xf32> to vector<8x16xf32>
    %c0_17 = arith.constant 0 : index
    %c5 = arith.constant 5 : index
    %c0_18 = arith.constant 0 : index
    %28 = vector.load %arg8[%c0_17, %c5, %c0_18] : memref<8x16x16xf32, #tpu.memory_space<vmem>>, vector<8x1x16xf32>
    %29 = vector.shape_cast %28 : vector<8x1x16xf32> to vector<8x16xf32>
    %30 = vector.shape_cast %27 : vector<8x16xf32> to vector<8x1x16xf32>
    tpu.vector_store %arg8[%c0_17, %c5, %c0_18], %30 {strides = array<i32>} : memref<8x16x16xf32, #tpu.memory_space<vmem>>, vector<8x1x16xf32>,
    %31 = vector.extract_strided_slice %6 {offsets = [0, 96], sizes = [8, 16], strides = [1, 1]} : vector<8x256xf32> to vector<8x16xf32>
    %c0_19 = arith.constant 0 : index
    %c6 = arith.constant 6 : index
    %c0_20 = arith.constant 0 : index
    %32 = vector.load %arg8[%c0_19, %c6, %c0_20] : memref<8x16x16xf32, #tpu.memory_space<vmem>>, vector<8x1x16xf32>
    %33 = vector.shape_cast %32 : vector<8x1x16xf32> to vector<8x16xf32>
    %34 = vector.shape_cast %31 : vector<8x16xf32> to vector<8x1x16xf32>
    tpu.vector_store %arg8[%c0_19, %c6, %c0_20], %34 {strides = array<i32>} : memref<8x16x16xf32, #tpu.memory_space<vmem>>, vector<8x1x16xf32>,
    %35 = vector.extract_strided_slice %6 {offsets = [0, 112], sizes = [8, 16], strides = [1, 1]} : vector<8x256xf32> to vector<8x16xf32>
    %c0_21 = arith.constant 0 : index
    %c7 = arith.constant 7 : index
    %c0_22 = arith.constant 0 : index
    %36 = vector.load %arg8[%c0_21, %c7, %c0_22] : memref<8x16x16xf32, #tpu.memory_space<vmem>>, vector<8x1x16xf32>
    %37 = vector.shape_cast %36 : vector<8x1x16xf32> to vector<8x16xf32>
    %38 = vector.shape_cast %35 : vector<8x16xf32> to vector<8x1x16xf32>
    tpu.vector_store %arg8[%c0_21, %c7, %c0_22], %38 {strides = array<i32>} : memref<8x16x16xf32, #tpu.memory_space<vmem>>, vector<8x1x16xf32>,
    %39 = vector.extract_strided_slice %6 {offsets = [0, 128], sizes = [8, 16], strides = [1, 1]} : vector<8x256xf32> to vector<8x16xf32>
    %c0_23 = arith.constant 0 : index
    %c8 = arith.constant 8 : index
    %c0_24 = arith.constant 0 : index
    %40 = vector.load %arg8[%c0_23, %c8, %c0_24] : memref<8x16x16xf32, #tpu.memory_space<vmem>>, vector<8x1x16xf32>
    %41 = vector.shape_cast %40 : vector<8x1x16xf32> to vector<8x16xf32>
    %42 = vector.shape_cast %39 : vector<8x16xf32> to vector<8x1x16xf32>
    tpu.vector_store %arg8[%c0_23, %c8, %c0_24], %42 {strides = array<i32>} : memref<8x16x16xf32, #tpu.memory_space<vmem>>, vector<8x1x16xf32>,
    %43 = vector.extract_strided_slice %6 {offsets = [0, 144], sizes = [8, 16], strides = [1, 1]} : vector<8x256xf32> to vector<8x16xf32>
    %c0_25 = arith.constant 0 : index
    %c9 = arith.constant 9 : index
    %c0_26 = arith.constant 0 : index
    %44 = vector.load %arg8[%c0_25, %c9, %c0_26] : memref<8x16x16xf32, #tpu.memory_space<vmem>>, vector<8x1x16xf32>
    %45 = vector.shape_cast %44 : vector<8x1x16xf32> to vector<8x16xf32>
    %46 = vector.shape_cast %43 : vector<8x16xf32> to vector<8x1x16xf32>
    tpu.vector_store %arg8[%c0_25, %c9, %c0_26], %46 {strides = array<i32>} : memref<8x16x16xf32, #tpu.memory_space<vmem>>, vector<8x1x16xf32>,
    %47 = vector.extract_strided_slice %6 {offsets = [0, 160], sizes = [8, 16], strides = [1, 1]} : vector<8x256xf32> to vector<8x16xf32>
    %c0_27 = arith.constant 0 : index
    %c10 = arith.constant 10 : index
    %c0_28 = arith.constant 0 : index
    %48 = vector.load %arg8[%c0_27, %c10, %c0_28] : memref<8x16x16xf32, #tpu.memory_space<vmem>>, vector<8x1x16xf32>
    %49 = vector.shape_cast %48 : vector<8x1x16xf32> to vector<8x16xf32>
    %50 = vector.shape_cast %47 : vector<8x16xf32> to vector<8x1x16xf32>
    tpu.vector_store %arg8[%c0_27, %c10, %c0_28], %50 {strides = array<i32>} : memref<8x16x16xf32, #tpu.memory_space<vmem>>, vector<8x1x16xf32>,
    %51 = vector.extract_strided_slice %6 {offsets = [0, 176], sizes = [8, 16], strides = [1, 1]} : vector<8x256xf32> to vector<8x16xf32>
    %c0_29 = arith.constant 0 : index
    %c11 = arith.constant 11 : index
    %c0_30 = arith.constant 0 : index
    %52 = vector.load %arg8[%c0_29, %c11, %c0_30] : memref<8x16x16xf32, #tpu.memory_space<vmem>>, vector<8x1x16xf32>
    %53 = vector.shape_cast %52 : vector<8x1x16xf32> to vector<8x16xf32>
    %54 = vector.shape_cast %51 : vector<8x16xf32> to vector<8x1x16xf32>
    tpu.vector_store %arg8[%c0_29, %c11, %c0_30], %54 {strides = array<i32>} : memref<8x16x16xf32, #tpu.memory_space<vmem>>, vector<8x1x16xf32>,
    %55 = vector.extract_strided_slice %6 {offsets = [0, 192], sizes = [8, 16], strides = [1, 1]} : vector<8x256xf32> to vector<8x16xf32>
    %c0_31 = arith.constant 0 : index
    %c12 = arith.constant 12 : index
    %c0_32 = arith.constant 0 : index
    %56 = vector.load %arg8[%c0_31, %c12, %c0_32] : memref<8x16x16xf32, #tpu.memory_space<vmem>>, vector<8x1x16xf32>
    %57 = vector.shape_cast %56 : vector<8x1x16xf32> to vector<8x16xf32>
    %58 = vector.shape_cast %55 : vector<8x16xf32> to vector<8x1x16xf32>
    tpu.vector_store %arg8[%c0_31, %c12, %c0_32], %58 {strides = array<i32>} : memref<8x16x16xf32, #tpu.memory_space<vmem>>, vector<8x1x16xf32>,
    %59 = vector.extract_strided_slice %6 {offsets = [0, 208], sizes = [8, 16], strides = [1, 1]} : vector<8x256xf32> to vector<8x16xf32>
    %c0_33 = arith.constant 0 : index
    %c13 = arith.constant 13 : index
    %c0_34 = arith.constant 0 : index
    %60 = vector.load %arg8[%c0_33, %c13, %c0_34] : memref<8x16x16xf32, #tpu.memory_space<vmem>>, vector<8x1x16xf32>
    %61 = vector.shape_cast %60 : vector<8x1x16xf32> to vector<8x16xf32>
    %62 = vector.shape_cast %59 : vector<8x16xf32> to vector<8x1x16xf32>
    tpu.vector_store %arg8[%c0_33, %c13, %c0_34], %62 {strides = array<i32>} : memref<8x16x16xf32, #tpu.memory_space<vmem>>, vector<8x1x16xf32>,
    %63 = vector.extract_strided_slice %6 {offsets = [0, 224], sizes = [8, 16], strides = [1, 1]} : vector<8x256xf32> to vector<8x16xf32>
    %c0_35 = arith.constant 0 : index
    %c14 = arith.constant 14 : index
    %c0_36 = arith.constant 0 : index
    %64 = vector.load %arg8[%c0_35, %c14, %c0_36] : memref<8x16x16xf32, #tpu.memory_space<vmem>>, vector<8x1x16xf32>
    %65 = vector.shape_cast %64 : vector<8x1x16xf32> to vector<8x16xf32>
    %66 = vector.shape_cast %63 : vector<8x16xf32> to vector<8x1x16xf32>
    tpu.vector_store %arg8[%c0_35, %c14, %c0_36], %66 {strides = array<i32>} : memref<8x16x16xf32, #tpu.memory_space<vmem>>, vector<8x1x16xf32>,
    %67 = vector.extract_strided_slice %6 {offsets = [0, 240], sizes = [8, 16], strides = [1, 1]} : vector<8x256xf32> to vector<8x16xf32>
    %c0_37 = arith.constant 0 : index
    %c15 = arith.constant 15 : index
    %c0_38 = arith.constant 0 : index
    %68 = vector.load %arg8[%c0_37, %c15, %c0_38] : memref<8x16x16xf32, #tpu.memory_space<vmem>>, vector<8x1x16xf32>
    %69 = vector.shape_cast %68 : vector<8x1x16xf32> to vector<8x16xf32>
    %70 = vector.shape_cast %67 : vector<8x16xf32> to vector<8x1x16xf32>
    tpu.vector_store %arg8[%c0_37, %c15, %c0_38], %70 {strides = array<i32>} : memref<8x16x16xf32, #tpu.memory_space<vmem>>, vector<8x1x16xf32>,
    %c0_39 = arith.constant 0 : index
    %c0_40 = arith.constant 0 : index
    %c0_41 = arith.constant 0 : index
    %71 = vector.load %arg8[%c0_39, %c0_40, %c0_41] : memref<8x16x16xf32, #tpu.memory_space<vmem>>, vector<8x16x16xf32>
    %c0_42 = arith.constant 0 : index
    %c0_43 = arith.constant 0 : index
    %72 = vector.load %arg4[%c0_42, %c0_43] : memref<32x16xf32, #tpu.memory_space<vmem>>, vector<32x16xf32>
    %73 = vector.shape_cast %72 : vector<32x16xf32> to vector<1x32x16xf32>
    %74 = vector.broadcast %73 : vector<1x32x16xf32> to vector<8x32x16xf32>
    "tpu.trace_start"() <{level = 10 : i32, message = "cyh,chw->cyw"}> : () -> ()
    %cst_44 = arith.constant dense<0.000000e+00> : vector<8x32x16xf32>
    %75 = tpu.matmul %74, %71, %cst_44 {dimension_numbers = #tpu.dot_dimension_numbers<[2], [1], [1], [2], [0, 0, 0, 1, 1, 2], [0], [0]>} : vector<8x32x16xf32>, vector<8x16x16xf32>, vector<8x32x16xf32> -> vector<8x32x16xf32>
    "tpu.trace_stop"() : () -> ()
    %c0_45 = arith.constant 0 : index
    %c0_46 = arith.constant 0 : index
    %76 = vector.load %arg5[%c0_45, %c0_46] : memref<16x32xf32, #tpu.memory_space<vmem>>, vector<16x32xf32>
    %77 = vector.shape_cast %76 : vector<16x32xf32> to vector<1x16x32xf32>
    %78 = vector.broadcast %77 : vector<1x16x32xf32> to vector<8x16x32xf32>
    "tpu.trace_start"() <{level = 10 : i32, message = "cyw,cwv->cyv"}> : () -> ()
    %cst_47 = arith.constant dense<0.000000e+00> : vector<8x32x32xf32>
    %79 = tpu.matmul %75, %78, %cst_47 {dimension_numbers = #tpu.dot_dimension_numbers<[2], [1], [1], [2], [0, 0, 0, 1, 1, 2], [0], [0]>} : vector<8x32x16xf32>, vector<8x16x32xf32>, vector<8x32x32xf32> -> vector<8x32x32xf32>
    "tpu.trace_stop"() : () -> ()
    %c0_48 = arith.constant 0 : index
    %c0_49 = arith.constant 0 : index
    %c0_50 = arith.constant 0 : index
    %c0_51 = arith.constant 0 : index
    %80 = vector.load %arg7[%c0_48, %c0_49, %c0_50, %c0_51] : memref<1x8x32x32xf32, #tpu.memory_space<vmem>>, vector<1x8x32x32xf32>
    %81 = vector.shape_cast %80 : vector<1x8x32x32xf32> to vector<8x32x32xf32>
    %82 = vector.shape_cast %79 : vector<8x32x32xf32> to vector<1x8x32x32xf32>
    tpu.vector_store %arg7[%c0_48, %c0_49, %c0_50, %c0_51], %82 {strides = array<i32>} : memref<1x8x32x32xf32, #tpu.memory_space<vmem>>, vector<1x8x32x32xf32>,
    return
  }
  func.func @transform_0(%arg0: i32, %arg1: i32) -> (i32, i32) {
    %c0_i32 = arith.constant 0 : i32
    %c0_i32_0 = arith.constant 0 : i32
    return %arg1, %c0_i32 : i32, i32
  }
  func.func @transform_1(%arg0: i32, %arg1: i32) -> (i32, i32) {
    %c0_i32 = arith.constant 0 : i32
    %c0_i32_0 = arith.constant 0 : i32
    return %arg1, %c0_i32 : i32, i32
  }
  func.func @transform_2(%arg0: i32, %arg1: i32) -> (i32, i32) {
    %c0_i32 = arith.constant 0 : i32
    %c0_i32_0 = arith.constant 0 : i32
    %c0_i32_1 = arith.constant 0 : i32
    return %c0_i32, %c0_i32_0 : i32, i32
  }
  func.func @transform_3(%arg0: i32, %arg1: i32) -> (i32, i32) {
    %c0_i32 = arith.constant 0 : i32
    %c0_i32_0 = arith.constant 0 : i32
    %c0_i32_1 = arith.constant 0 : i32
    return %c0_i32, %c0_i32_0 : i32, i32
  }
  func.func @transform_4(%arg0: i32, %arg1: i32) -> (i32, i32, i32) {
    %c0_i32 = arith.constant 0 : i32
    %c0_i32_0 = arith.constant 0 : i32
    %c0_i32_1 = arith.constant 0 : i32
    return %arg0, %c0_i32, %c0_i32_0 : i32, i32, i32
  }
  func.func @transform_5(%arg0: i32, %arg1: i32) -> (i32, i32, i32, i32) {
    %c0_i32 = arith.constant 0 : i32
    %c0_i32_0 = arith.constant 0 : i32
    %c0_i32_1 = arith.constant 0 : i32
    return %arg0, %arg1, %c0_i32, %c0_i32_0 : i32, i32, i32, i32
  }
}

</mosaic_0001>

<llo_original>
// kernel: tpu_custom_call.1
$region0: #{tpu_custom_call.1}
  #allocation0 [shape = 'u32[]', space=smem, size = 0x4, offset = 0x4, fixed_abs, tag = 'smem constant byte address 0x4 - core index']
  #allocation1 [shape = 'u32[144,128]{1,0:T(1,128)}', space=vmem, size = 0x12000, scoped, tag = 'internal scratch']
  #allocation2 [shape = 'f32[8,16,16]{2,1,0:T(8,128)}', space=vmem, size = 0x10000, scoped, tag = 'scratch operand']
  %s0 = inlined_call_operand.vmem [shape: f32[8,4], index: 0, kind: input, shape index: {}]
  %s1 = inlined_call_operand.vmem [shape: f32[8,1], index: 1, kind: input, shape index: {}]
  %s2 = inlined_call_operand.vmem [shape: f32[32,16], index: 2, kind: input, shape index: {}]
  %s3 = inlined_call_operand.vmem [shape: f32[16,32], index: 3, kind: input, shape index: {}]
  %s4 = inlined_call_operand.vmem [shape: f32[2,4,256], index: 4, kind: input, shape index: {}]
  %s5 = inlined_call_operand.hbm [shape: f32[2,8,32,32], index: 5, kind: output, shape index: {}]
  %s6 = sld [smem:[#allocation0]]
  $region53: #{tpu_custom_call.1} parent=0
    _
  %s8 = ssub.s32 1, %s6
  %s9 = scalar_select 0, %s8, %s6
  $region1: #{tpu_custom_call.1} parent=0
    #allocation3 [shape = 'u8[262144]{0}', space=vmem, size = 0x40000, scoped, tag = 'output window, operand 0']
    #allocation4 [shape = 's32[2]{0}', space=sflag, size = 0x8, scoped, tag = 'scoped memory for tpu_custom_call.1']
    %10 = vsyncpa [#allocation4], 0
    %s11 = scalar_lea.sflag [#allocation4], 1
    %12 = vsyncpa %s11, 0
    loop: start=0, step=1, limit=4
    $region2: #{tpu_custom_call.1} parent=1 // loop_pre_header
      _
    $region3: #{tpu_custom_call.1} parent=1 // loop_header
      %s14 = sphi 0, %s18
      %p15 = scmp.ge.s32.totalorder %s14, 4
      %s21 = sphi 0, %s33
      %s22 = sphi 0, %s29
      %s23 = sphi 0, %s21
      %s24 = sphi 0, %s22
      %s25 = sphi 0, %s23
      %s26 = sphi 0, %s24
      %s36 = sphi 0, %s38
      %s39 = sphi 0, %s36
      %s40 = sphi 0, %s39
      %s56 = sphi 0, %s40
      %s62 = sphi 0, %s64
      %s65 = sphi 0, %s62
      %s66 = sphi 0, %s65
      %s82 = sphi 0, %s66
      %s86 = sphi 0, %s86
      %s88 = sphi 0, %s86
      %s89 = sphi 0, %s88
      %s103 = sphi 0, %s89
      %s107 = sphi 0, %s107
      %s109 = sphi 0, %s107
      %s110 = sphi 0, %s109
      %s124 = sphi 0, %s110
      %s130 = sphi 0, %s132
      %s133 = sphi 0, %s130
      %s134 = sphi 0, %s133
      %s150 = sphi 0, %s134
      %s158 = sphi 0, %s160
      %s161 = sphi 0, %s158
      %s162 = sphi 0, %s161
      %s178 = sphi 0, %s162
    $region4: #{tpu_custom_call.1} parent=1 // loop_header_branch
      %17 = sbr.rel (%p15) target = $region8
    $region5: #{tpu_custom_call.1} parent=1 // loop_body
      %s19 = ssub.s32 %s14, 1
      %s20 = ssub.s32 %s14, 2
      %s27 = sadd.s32 1, %s22
      %p28 = scmp.ge.s32.totalorder %s27, 1
      %s29 = scalar_select %p28, 0, %s27
      %s30 = sadd.s32 1, %s21
      %s31 = scalar_select %p28, %s30, %s21
      %p32 = scmp.ge.s32.totalorder %s31, 2
      %s33 = scalar_select %p32, 0, %s31
      %s34 = ssub.s32 %s22, %s29
      %p35 = scmp.eq.s32.totalorder %s34, 0
      %s37 = sadd.s32 %s36, 1
      %s38 = scalar_select %p35, %s36, %s37
      %p41 = pneg %p35
      %p42 = scmp.eq.s32.totalorder %s14, 1
      %p43 = por %p41, %p42
      %p44 = scmp.ne.s32.totalorder %s36, %s39
      %p45 = scmp.eq.s32.totalorder %s14, 0
      %p46 = por %p44, %p45
      %p47 = scmp.ne.s32.totalorder %s36, %s39
      %p48 = scmp.eq.s32.totalorder %s19, 1
      %p49 = por %p47, %p48
      %p50 = scmp.ne.s32.totalorder %s39, %s40
      %p51 = scmp.eq.s32.totalorder %s19, 0
      %p52 = por %p50, %p51
      %p53 = scmp.ne.s32.totalorder %s39, %s40
      %p54 = scmp.eq.s32.totalorder %s20, 1
      %p55 = por %p53, %p54
      %p57 = scmp.ne.s32.totalorder %s40, %s56
      %p58 = scmp.eq.s32.totalorder %s20, 0
      %p59 = por %p57, %p58
      %s60 = ssub.s32 %s22, %s29
      %p61 = scmp.eq.s32.totalorder %s60, 0
      %s63 = sadd.s32 %s62, 1
      %s64 = scalar_select %p61, %s62, %s63
      %p67 = pneg %p61
      %p68 = scmp.eq.s32.totalorder %s14, 1
      %p69 = por %p67, %p68
      %p70 = scmp.ne.s32.totalorder %s62, %s65
      %p71 = scmp.eq.s32.totalorder %s14, 0
      %p72 = por %p70, %p71
      %p73 = scmp.ne.s32.totalorder %s62, %s65
      %p74 = scmp.eq.s32.totalorder %s19, 1
      %p75 = por %p73, %p74
      %p76 = scmp.ne.s32.totalorder %s65, %s66
      %p77 = scmp.eq.s32.totalorder %s19, 0
      %p78 = por %p76, %p77
      %p79 = scmp.ne.s32.totalorder %s65, %s66
      %p80 = scmp.eq.s32.totalorder %s20, 1
      %p81 = por %p79, %p80
      %p83 = scmp.ne.s32.totalorder %s66, %s82
      %p84 = scmp.eq.s32.totalorder %s20, 0
      %p85 = por %p83, %p84
      %s87 = sadd.s32 %s86, 1
      %p90 = scmp.eq.s32.totalorder %s14, 1
      %p91 = scmp.ne.s32.totalorder %s86, %s88
      %p92 = scmp.eq.s32.totalorder %s14, 0
      %p93 = por %p91, %p92
      %p94 = scmp.ne.s32.totalorder %s86, %s88
      %p95 = scmp.eq.s32.totalorder %s19, 1
      %p96 = por %p94, %p95
      %p97 = scmp.ne.s32.totalorder %s88, %s89
      %p98 = scmp.eq.s32.totalorder %s19, 0
      %p99 = por %p97, %p98
      %p100 = scmp.ne.s32.totalorder %s88, %s89
      %p101 = scmp.eq.s32.totalorder %s20, 1
      %p102 = por %p100, %p101
      %p104 = scmp.ne.s32.totalorder %s89, %s103
      %p105 = scmp.eq.s32.totalorder %s20, 0
      %p106 = por %p104, %p105
      %s108 = sadd.s32 %s107, 1
      %p111 = scmp.eq.s32.totalorder %s14, 1
      %p112 = scmp.ne.s32.totalorder %s107, %s109
      %p113 = scmp.eq.s32.totalorder %s14, 0
      %p114 = por %p112, %p113
      %p115 = scmp.ne.s32.totalorder %s107, %s109
      %p116 = scmp.eq.s32.totalorder %s19, 1
      %p117 = por %p115, %p116
      %p118 = scmp.ne.s32.totalorder %s109, %s110
      %p119 = scmp.eq.s32.totalorder %s19, 0
      %p120 = por %p118, %p119
      %p121 = scmp.ne.s32.totalorder %s109, %s110
      %p122 = scmp.eq.s32.totalorder %s20, 1
      %p123 = por %p121, %p122
      %p125 = scmp.ne.s32.totalorder %s110, %s124
      %p126 = scmp.eq.s32.totalorder %s20, 0
      %p127 = por %p125, %p126
      %s128 = ssub.s32 %s21, %s33
      %p129 = scmp.eq.s32.totalorder %s128, 0
      %s131 = sadd.s32 %s130, 1
      %s132 = scalar_select %p129, %s130, %s131
      %p135 = pneg %p129
      %p136 = scmp.eq.s32.totalorder %s14, 1
      %p137 = por %p135, %p136
      %p138 = scmp.ne.s32.totalorder %s130, %s133
      %p139 = scmp.eq.s32.totalorder %s14, 0
      %p140 = por %p138, %p139
      %p141 = scmp.ne.s32.totalorder %s130, %s133
      %p142 = scmp.eq.s32.totalorder %s19, 1
      %p143 = por %p141, %p142
      %p144 = scmp.ne.s32.totalorder %s133, %s134
      %p145 = scmp.eq.s32.totalorder %s19, 0
      %p146 = por %p144, %p145
      %p147 = scmp.ne.s32.totalorder %s133, %s134
      %p148 = scmp.eq.s32.totalorder %s20, 1
      %p149 = por %p147, %p148
      %p151 = scmp.ne.s32.totalorder %s134, %s150
      %p152 = scmp.eq.s32.totalorder %s20, 0
      %p153 = por %p151, %p152
      %s154 = ssub.s32 %s21, %s33
      %s155 = ssub.s32 %s22, %s29
      %s156 = sor.u32 %s154, %s155
      %p157 = scmp.eq.s32.totalorder %s156, 0
      %s159 = sadd.s32 %s158, 1
      %s160 = scalar_select %p157, %s158, %s159
      %p163 = pneg %p157
      %p164 = scmp.eq.s32.totalorder %s14, 1
      %p165 = por %p163, %p164
      %p166 = scmp.ne.s32.totalorder %s158, %s161
      %p167 = scmp.eq.s32.totalorder %s14, 0
      %p168 = por %p166, %p167
      %p169 = scmp.ne.s32.totalorder %s158, %s161
      %p170 = scmp.eq.s32.totalorder %s19, 1
      %p171 = por %p169, %p170
      %p172 = scmp.ne.s32.totalorder %s161, %s162
      %p173 = scmp.eq.s32.totalorder %s19, 0
      %p174 = por %p172, %p173
      %p175 = scmp.ne.s32.totalorder %s161, %s162
      %p176 = scmp.eq.s32.totalorder %s20, 1
      %p177 = por %p175, %p176
      %p179 = scmp.ne.s32.totalorder %s162, %s178
      %p180 = scmp.eq.s32.totalorder %s20, 0
      %p181 = por %p179, %p180
      %p182 = scmp.le.s32.totalorder 1, %s14
      %p183 = scmp.lt.s32.totalorder %s14, 3
      %p184 = pnand %p182, %p183
      %p185 = pneg %p184
      // Predicated region
      $region9: #{tpu_custom_call.1} parent=5 // pred_check
        _
      $region10: #{tpu_custom_call.1} parent=5 // pred_check_branch
        %187 = sbr.rel (%p184) target = $region12
      $region11: #{tpu_custom_call.1} parent=5 // pred_region
        %s188 = ssub.s32 %s14, 1
        // Predicated region
        $region13: #{tpu_custom_call.1} parent=11 // pred_check
          %p189 = pneg %p52
        $region14: #{tpu_custom_call.1} parent=11 // pred_check_branch
          %191 = sbr.rel (%p189) target = $region16
        $region15: #{tpu_custom_call.1} parent=11 // pred_region
          %p192 = scmp.lt.s32.totalorder %s24, 0
          %s193 = scalar_select %p192, %s24, 0
          %s194 = smul.addr %s193, 8
          %s195 = scalar_lea.vmem %s0, %s194
        $region16: #{tpu_custom_call.1} parent=11 // pred_fallthru
          _
        // Predicated region
        $region17: #{tpu_custom_call.1} parent=11 // pred_check
          %p196 = pneg %p78
        $region18: #{tpu_custom_call.1} parent=11 // pred_check_branch
          %198 = sbr.rel (%p196) target = $region20
        $region19: #{tpu_custom_call.1} parent=11 // pred_region
          %p199 = scmp.lt.s32.totalorder %s24, 0
          %s200 = scalar_select %p199, %s24, 0
          %s201 = smul.addr %s200, 8
          %s202 = scalar_lea.vmem %s1, %s201
        $region20: #{tpu_custom_call.1} parent=11 // pred_fallthru
          _
        // Predicated region
        $region21: #{tpu_custom_call.1} parent=11 // pred_check
          %p203 = pneg %p99
        $region22: #{tpu_custom_call.1} parent=11 // pred_check_branch
          %205 = sbr.rel (%p203) target = $region24
        $region23: #{tpu_custom_call.1} parent=11 // pred_region
          _
        $region24: #{tpu_custom_call.1} parent=11 // pred_fallthru
          _
        // Predicated region
        $region25: #{tpu_custom_call.1} parent=11 // pred_check
          %p206 = pneg %p120
        $region26: #{tpu_custom_call.1} parent=11 // pred_check_branch
          %208 = sbr.rel (%p206) target = $region28
        $region27: #{tpu_custom_call.1} parent=11 // pred_region
          _
        $region28: #{tpu_custom_call.1} parent=11 // pred_fallthru
          _
      $region12: #{tpu_custom_call.1} parent=5 // pred_fallthru
        _
      %p209 = scmp.lt.s32.totalorder %s14, 2
      // Predicated region
      $region29: #{tpu_custom_call.1} parent=5 // pred_check
        %p210 = pneg %p209
      $region30: #{tpu_custom_call.1} parent=5 // pred_check_branch
        %212 = sbr.rel (%p210) target = $region32
      $region31: #{tpu_custom_call.1} parent=5 // pred_region
        // Predicated region
        $region33: #{tpu_custom_call.1} parent=31 // pred_check
          %p213 = pneg %p140
        $region34: #{tpu_custom_call.1} parent=31 // pred_check_branch
          %215 = sbr.rel (%p213) target = $region36
        $region35: #{tpu_custom_call.1} parent=31 // pred_region
          %p216 = scmp.lt.s32.totalorder %s21, 1
          %s217 = scalar_select %p216, %s21, 1
          %s218 = smul.addr %s217, 2
          %s219 = smul.addr %s218, 4
          %s220 = scalar_lea.vmem %s4, %s219
        $region36: #{tpu_custom_call.1} parent=31 // pred_fallthru
          _
      $region32: #{tpu_custom_call.1} parent=5 // pred_fallthru
        _
      %p221 = scmp.le.s32.totalorder 1, %s14
      %p222 = scmp.lt.s32.totalorder %s14, 3
      %p223 = pnand %p221, %p222
      %p224 = pneg %p223
      // Predicated region
      $region37: #{tpu_custom_call.1} parent=5 // pred_check
        _
      $region38: #{tpu_custom_call.1} parent=5 // pred_check_branch
        %226 = sbr.rel (%p223) target = $region40
      $region39: #{tpu_custom_call.1} parent=5 // pred_region
        %s227 = ssub.s32 %s14, 1
        %p228 = scmp.lt.s32.totalorder %s24, 0
        %s229 = scalar_select %p228, %s24, 0
        %s230 = smul.addr %s229, 8
        %s231 = scalar_lea.vmem %s0, %s230
        %p232 = pneg %p52
        %p233 = pneg %p49
        %p234 = scmp.lt.s32.totalorder %s24, 0
        %s235 = scalar_select %p234, %s24, 0
        %s236 = smul.addr %s235, 8
        %s237 = scalar_lea.vmem %s1, %s236
        %p238 = pneg %p78
        %p239 = pneg %p75
        %p240 = pneg %p99
        %p241 = pneg %p96
        %p242 = pneg %p120
        %p243 = pneg %p117
        %p244 = scmp.lt.s32.totalorder %s23, 1
        %s245 = scalar_select %p244, %s23, 1
        %s246 = smul.addr %s245, 2
        %s247 = smul.addr %s246, 4
        %s248 = scalar_lea.vmem %s4, %s247
        %p249 = pneg %p146
        %p250 = pneg %p143
        %p251 = pneg %p174
        %p252 = pneg %p171
        %s253 = sand.u32 %s161, 1
        %s254 = scalar_lea.sflag [#allocation4], %s253
        %s255 = sand.u32 %s161, 1
        %s256 = smul.addr %s255, 256
        %s257 = scalar_lea.vmem [#allocation3], %s256
        %p258 = scmp.lt.s32.totalorder %s24, 0
        %s259 = scalar_select %p258, %s24, 0
        %s260 = smul.addr %s259, 8
        %s261 = scalar_lea.vmem %s0, %s260
        %p262 = scmp.lt.s32.totalorder %s24, 0
        %s263 = scalar_select %p262, %s24, 0
        %s264 = smul.addr %s263, 8
        %s265 = scalar_lea.vmem %s1, %s264
        %p266 = scmp.lt.s32.totalorder %s23, 1
        %s267 = scalar_select %p266, %s23, 1
        %s268 = smul.addr %s267, 2
        %s269 = smul.addr %s268, 4
        %s270 = scalar_lea.vmem %s4, %s269
        %s271 = smul.u32 8, %s24
        %v272 = vld [vmem:[%s270] sm:$0xff]
        %v273 = vld [vmem:[%s261] sm:$0xff]
        %v274 = vld [vmem:[%s265] sm:$0xff]
        %276 = vset.pattern.permute.xlu0 0
        %277 = vperm.xlu0 %276, %v274
        %v278 = vpop.permute.xlu0 %277
        %v281 = vcombine.high %v272, %v272
        %vm282 = vcmask 31744
        %v284 = vsel %vm282, %v273, 0
        %vm286 = vcmask 1043456
        %v287 = vsel %vm286, %v272, 0
        %v289 = vsel %vm286, %v281, 0
        %291 = vmatprep.subr.mxu0 0.0
        %292 = vmatpush1.msra.mxu0 0.0
        %293 = vmatprep.subr.mxu0 0.0
        %294 = vmatpush1.msra.mxu0 0.0
        %295 = vmatprep.subr.mxu0 0.0
        %296 = vmatpush1.msra.mxu0 0.0
        %297 = vmatprep.subr.mxu0 0.0
        %298 = vmatpush1.msra.mxu0 0.0
        %299 = vmatprep.subr.mxu0 0.0
        %300 = vmatpush1.msra.mxu0 0.0
        %301 = vmatprep.subr.mxu0 0.0
        %302 = vmatpush1.msra.mxu0 0.0
        %303 = vmatprep.subr.mxu0 0.0
        %304 = vmatpush1.msra.mxu0 0.0
        %305 = vmatprep.subr.mxu0 0.0
        %306 = vmatpush1.msra.mxu0 0.0
        %307 = vmatprep.subr.mxu0 0.0
        %308 = vmatpush1.msra.mxu0 0.0
        %309 = vmatprep.subr.mxu0 0.0
        %310 = vmatpush1.msra.mxu0 0.0
        %311 = vmatprep.subr.mxu0 0.0
        %312 = vmatpush1.msra.mxu0 0.0
        %313 = vmatprep.subr.mxu0 0.0
        %314 = vmatpush1.msra.mxu0 0.0
        %315 = vmatprep.subr.mxu0 0.0
        %316 = vmatpush1.msra.mxu0 0.0
        %317 = vmatprep.subr.mxu0 0.0
        %318 = vmatpush1.msra.mxu0 0.0
        %319 = vmatprep.subr.mxu0 0.0
        %320 = vmatpush1.msra.mxu0 0.0
        %321 = vmatprep.subr.mxu0 %v289
        %322 = vmatpush1.msra.mxu0 %v287
        %323 = vmatprep.subr.mxu0 0.0
        %324 = vmatpush2.msra.mxu0 0.0
        %325 = vmatprep.subr.mxu0 0.0
        %326 = vmatpush2.msra.mxu0 0.0
        %327 = vmatprep.subr.mxu0 0.0
        %328 = vmatpush2.msra.mxu0 0.0
        %329 = vmatprep.subr.mxu0 0.0
        %330 = vmatpush2.msra.mxu0 0.0
        %331 = vmatprep.subr.mxu0 0.0
        %332 = vmatpush2.msra.mxu0 0.0
        %333 = vmatprep.subr.mxu0 0.0
        %334 = vmatpush2.msra.mxu0 0.0
        %335 = vmatprep.subr.mxu0 0.0
        %336 = vmatpush2.msra.mxu0 0.0
        %337 = vmatprep.subr.mxu0 0.0
        %338 = vmatpush2.msra.mxu0 0.0
        %339 = vmatprep.subr.mxu0 0.0
        %340 = vmatpush2.msra.mxu0 0.0
        %341 = vmatprep.subr.mxu0 0.0
        %342 = vmatpush2.msra.mxu0 0.0
        %343 = vmatprep.subr.mxu0 0.0
        %344 = vmatpush2.msra.mxu0 0.0
        %345 = vmatprep.subr.mxu0 0.0
        %346 = vmatpush2.msra.mxu0 0.0
        %347 = vmatprep.subr.mxu0 0.0
        %348 = vmatpush2.msra.mxu0 0.0
        %349 = vmatprep.subr.mxu0 0.0
        %350 = vmatpush2.msra.mxu0 0.0
        %351 = vmatprep.subr.mxu0 0.0
        %352 = vmatpush2.msra.mxu0 0.0
        %353 = vmatprep.subr.mxu0 0.0
        %354 = vmatpush2.msra.mxu0 0.0
        %355 = vmatprep.mubr.f32.mxu0 0.0
        %356 = vmatmul.mubr.f32.gmra.mxu0 %v284
        %v357 = vpop.f32.mrf.mxu0
        %v358 = vadd.f32 %v278, %v357
        %v359 = vpop.f32.mrf.mxu0
        %v360 = vadd.f32 %v278, %v359
        %361 = vdwg.mxu0
        %v363 = vcombine.high %v358, %v358
        %v365 = vunpack.c.l.s4 1966171168
        %v366 = vunpack.c.0.s8 %v365
        %v367 = vlaneseq
        %v368 = vshrl.u32 %v367, 7
        %v369 = vsub.s32 %v366, %v368
        %v370 = vrot.slane %v358, %v369
        %v372 = vunpack.c.l.s4 1966171168
        %v373 = vunpack.c.0.s8 %v372
        %v374 = vlaneseq
        %v375 = vshrl.u32 %v374, 7
        %v376 = vsub.s32 %v373, %v375
        %v377 = vrot.slane %v363, %v376
        %v378 = vcombine.high %v370, %v370
        %v379 = vcombine.high %v377, %v377
        %v381 = vunpack.c.l.s4 1966171168
        %v382 = vunpack.c.0.s8 %v381
        %v383 = vlaneseq
        %v384 = vshrl.u32 %v383, 7
        %v385 = vsub.s32 %v382, %v384
        %v386 = vrot.slane %v370, %v385
        %v388 = vunpack.c.l.s4 1966171168
        %v389 = vunpack.c.0.s8 %v388
        %v390 = vlaneseq
        %v391 = vshrl.u32 %v390, 7
        %v392 = vsub.s32 %v389, %v391
        %v393 = vrot.slane %v377, %v392
        %v395 = vunpack.c.l.s4 1966171168
        %v396 = vunpack.c.0.s8 %v395
        %v397 = vlaneseq
        %v398 = vshrl.u32 %v397, 7
        %v399 = vsub.s32 %v396, %v398
        %v400 = vrot.slane %v378, %v399
        %v402 = vunpack.c.l.s4 1966171168
        %v403 = vunpack.c.0.s8 %v402
        %v404 = vlaneseq
        %v405 = vshrl.u32 %v404, 7
        %v406 = vsub.s32 %v403, %v405
        %v407 = vrot.slane %v379, %v406
        %v408 = vcombine.high %v386, %v386
        %v409 = vcombine.high %v393, %v393
        %v410 = vcombine.high %v400, %v400
        %v411 = vcombine.high %v407, %v407
        %vm420 = vcmask 122880
        %421 = vst.msk [vmem:[#allocation2] sm:$0x1] %vm420, %v386
        %422 = vst.msk [vmem:[#allocation2 + $0x10] sm:$0x1] %vm420, %v400
        %423 = vst.msk [vmem:[#allocation2 + $0x20] sm:$0x1] %vm420, %v408
        %424 = vst.msk [vmem:[#allocation2 + $0x30] sm:$0x1] %vm420, %v410
        %425 = vst.msk [vmem:[#allocation2 + $0x40] sm:$0x1] %vm420, %v393
        %426 = vst.msk [vmem:[#allocation2 + $0x50] sm:$0x1] %vm420, %v407
        %427 = vst.msk [vmem:[#allocation2 + $0x60] sm:$0x1] %vm420, %v409
        %428 = vst.msk [vmem:[#allocation2 + $0x70] sm:$0x1] %vm420, %v411
        %v429 = vlaneseq
        %v430 = vshrl.u32 %v429, 7
        %v431 = vsub.s32 0, %v430
        %v432 = vrot.slane %v386, %v431
        %v433 = vlaneseq
        %v434 = vshrl.u32 %v433, 7
        %v435 = vsub.s32 0, %v434
        %v436 = vrot.slane %v400, %v435
        %v437 = vlaneseq
        %v438 = vshrl.u32 %v437, 7
        %v439 = vsub.s32 0, %v438
        %v440 = vrot.slane %v408, %v439
        %v441 = vlaneseq
        %v442 = vshrl.u32 %v441, 7
        %v443 = vsub.s32 0, %v442
        %v444 = vrot.slane %v410, %v443
        %v445 = vlaneseq
        %v446 = vshrl.u32 %v445, 7
        %v447 = vsub.s32 0, %v446
        %v448 = vrot.slane %v393, %v447
        %v449 = vlaneseq
        %v450 = vshrl.u32 %v449, 7
        %v451 = vsub.s32 0, %v450
        %v452 = vrot.slane %v407, %v451
        %v453 = vlaneseq
        %v454 = vshrl.u32 %v453, 7
        %v455 = vsub.s32 0, %v454
        %v456 = vrot.slane %v409, %v455
        %v457 = vlaneseq
        %v458 = vshrl.u32 %v457, 7
        %v459 = vsub.s32 0, %v458
        %v460 = vrot.slane %v411, %v459
        %461 = vrot.lane.b32.xlu0 %v432, 112
        %v462 = vpop.permute.xlu0 %461
        %463 = vrot.lane.b32.xlu0 %v436, 112
        %v464 = vpop.permute.xlu0 %463
        %465 = vrot.lane.b32.xlu0 %v440, 112
        %v466 = vpop.permute.xlu0 %465
        %467 = vrot.lane.b32.xlu0 %v444, 112
        %v468 = vpop.permute.xlu0 %467
        %469 = vrot.lane.b32.xlu0 %v448, 112
        %v470 = vpop.permute.xlu0 %469
        %471 = vrot.lane.b32.xlu0 %v452, 112
        %v472 = vpop.permute.xlu0 %471
        %473 = vrot.lane.b32.xlu0 %v456, 112
        %v474 = vpop.permute.xlu0 %473
        %475 = vrot.lane.b32.xlu0 %v460, 112
        %v476 = vpop.permute.xlu0 %475
        %485 = vst.msk [vmem:[#allocation2 + $0x1] sm:$0x1] %vm420, %v462
        %486 = vst.msk [vmem:[#allocation2 + $0x11] sm:$0x1] %vm420, %v464
        %487 = vst.msk [vmem:[#allocation2 + $0x21] sm:$0x1] %vm420, %v466
        %488 = vst.msk [vmem:[#allocation2 + $0x31] sm:$0x1] %vm420, %v468
        %489 = vst.msk [vmem:[#allocation2 + $0x41] sm:$0x1] %vm420, %v470
        %490 = vst.msk [vmem:[#allocation2 + $0x51] sm:$0x1] %vm420, %v472
        %491 = vst.msk [vmem:[#allocation2 + $0x61] sm:$0x1] %vm420, %v474
        %492 = vst.msk [vmem:[#allocation2 + $0x71] sm:$0x1] %vm420, %v476
        %493 = vrot.lane.b32.xlu0 %v432, 96
        %v494 = vpop.permute.xlu0 %493
        %495 = vrot.lane.b32.xlu0 %v436, 96
        %v496 = vpop.permute.xlu0 %495
        %497 = vrot.lane.b32.xlu0 %v440, 96
        %v498 = vpop.permute.xlu0 %497
        %499 = vrot.lane.b32.xlu0 %v444, 96
        %v500 = vpop.permute.xlu0 %499
        %501 = vrot.lane.b32.xlu0 %v448, 96
        %v502 = vpop.permute.xlu0 %501
        %503 = vrot.lane.b32.xlu0 %v452, 96
        %v504 = vpop.permute.xlu0 %503
        %505 = vrot.lane.b32.xlu0 %v456, 96
        %v506 = vpop.permute.xlu0 %505
        %507 = vrot.lane.b32.xlu0 %v460, 96
        %v508 = vpop.permute.xlu0 %507
        %517 = vst.msk [vmem:[#allocation2 + $0x2] sm:$0x1] %vm420, %v494
        %518 = vst.msk [vmem:[#allocation2 + $0x12] sm:$0x1] %vm420, %v496
        %519 = vst.msk [vmem:[#allocation2 + $0x22] sm:$0x1] %vm420, %v498
        %520 = vst.msk [vmem:[#allocation2 + $0x32] sm:$0x1] %vm420, %v500
        %521 = vst.msk [vmem:[#allocation2 + $0x42] sm:$0x1] %vm420, %v502
        %522 = vst.msk [vmem:[#allocation2 + $0x52] sm:$0x1] %vm420, %v504
        %523 = vst.msk [vmem:[#allocation2 + $0x62] sm:$0x1] %vm420, %v506
        %524 = vst.msk [vmem:[#allocation2 + $0x72] sm:$0x1] %vm420, %v508
        %525 = vrot.lane.b32.xlu0 %v432, 80
        %v526 = vpop.permute.xlu0 %525
        %527 = vrot.lane.b32.xlu0 %v436, 80
        %v528 = vpop.permute.xlu0 %527
        %529 = vrot.lane.b32.xlu0 %v440, 80
        %v530 = vpop.permute.xlu0 %529
        %531 = vrot.lane.b32.xlu0 %v444, 80
        %v532 = vpop.permute.xlu0 %531
        %533 = vrot.lane.b32.xlu0 %v448, 80
        %v534 = vpop.permute.xlu0 %533
        %535 = vrot.lane.b32.xlu0 %v452, 80
        %v536 = vpop.permute.xlu0 %535
        %537 = vrot.lane.b32.xlu0 %v456, 80
        %v538 = vpop.permute.xlu0 %537
        %539 = vrot.lane.b32.xlu0 %v460, 80
        %v540 = vpop.permute.xlu0 %539
        %549 = vst.msk [vmem:[#allocation2 + $0x3] sm:$0x1] %vm420, %v526
        %550 = vst.msk [vmem:[#allocation2 + $0x13] sm:$0x1] %vm420, %v528
        %551 = vst.msk [vmem:[#allocation2 + $0x23] sm:$0x1] %vm420, %v530
        %552 = vst.msk [vmem:[#allocation2 + $0x33] sm:$0x1] %vm420, %v532
        %553 = vst.msk [vmem:[#allocation2 + $0x43] sm:$0x1] %vm420, %v534
        %554 = vst.msk [vmem:[#allocation2 + $0x53] sm:$0x1] %vm420, %v536
        %555 = vst.msk [vmem:[#allocation2 + $0x63] sm:$0x1] %vm420, %v538
        %556 = vst.msk [vmem:[#allocation2 + $0x73] sm:$0x1] %vm420, %v540
        %557 = vrot.lane.b32.xlu0 %v432, 64
        %v558 = vpop.permute.xlu0 %557
        %559 = vrot.lane.b32.xlu0 %v436, 64
        %v560 = vpop.permute.xlu0 %559
        %561 = vrot.lane.b32.xlu0 %v440, 64
        %v562 = vpop.permute.xlu0 %561
        %563 = vrot.lane.b32.xlu0 %v444, 64
        %v564 = vpop.permute.xlu0 %563
        %565 = vrot.lane.b32.xlu0 %v448, 64
        %v566 = vpop.permute.xlu0 %565
        %567 = vrot.lane.b32.xlu0 %v452, 64
        %v568 = vpop.permute.xlu0 %567
        %569 = vrot.lane.b32.xlu0 %v456, 64
        %v570 = vpop.permute.xlu0 %569
        %571 = vrot.lane.b32.xlu0 %v460, 64
        %v572 = vpop.permute.xlu0 %571
        %581 = vst.msk [vmem:[#allocation2 + $0x4] sm:$0x1] %vm420, %v558
        %582 = vst.msk [vmem:[#allocation2 + $0x14] sm:$0x1] %vm420, %v560
        %583 = vst.msk [vmem:[#allocation2 + $0x24] sm:$0x1] %vm420, %v562
        %584 = vst.msk [vmem:[#allocation2 + $0x34] sm:$0x1] %vm420, %v564
        %585 = vst.msk [vmem:[#allocation2 + $0x44] sm:$0x1] %vm420, %v566
        %586 = vst.msk [vmem:[#allocation2 + $0x54] sm:$0x1] %vm420, %v568
        %587 = vst.msk [vmem:[#allocation2 + $0x64] sm:$0x1] %vm420, %v570
        %588 = vst.msk [vmem:[#allocation2 + $0x74] sm:$0x1] %vm420, %v572
        %589 = vrot.lane.b32.xlu0 %v432, 48
        %v590 = vpop.permute.xlu0 %589
        %591 = vrot.lane.b32.xlu0 %v436, 48
        %v592 = vpop.permute.xlu0 %591
        %593 = vrot.lane.b32.xlu0 %v440, 48
        %v594 = vpop.permute.xlu0 %593
        %595 = vrot.lane.b32.xlu0 %v444, 48
        %v596 = vpop.permute.xlu0 %595
        %597 = vrot.lane.b32.xlu0 %v448, 48
        %v598 = vpop.permute.xlu0 %597
        %599 = vrot.lane.b32.xlu0 %v452, 48
        %v600 = vpop.permute.xlu0 %599
        %601 = vrot.lane.b32.xlu0 %v456, 48
        %v602 = vpop.permute.xlu0 %601
        %603 = vrot.lane.b32.xlu0 %v460, 48
        %v604 = vpop.permute.xlu0 %603
        %613 = vst.msk [vmem:[#allocation2 + $0x5] sm:$0x1] %vm420, %v590
        %614 = vst.msk [vmem:[#allocation2 + $0x15] sm:$0x1] %vm420, %v592
        %615 = vst.msk [vmem:[#allocation2 + $0x25] sm:$0x1] %vm420, %v594
        %616 = vst.msk [vmem:[#allocation2 + $0x35] sm:$0x1] %vm420, %v596
        %617 = vst.msk [vmem:[#allocation2 + $0x45] sm:$0x1] %vm420, %v598
        %618 = vst.msk [vmem:[#allocation2 + $0x55] sm:$0x1] %vm420, %v600
        %619 = vst.msk [vmem:[#allocation2 + $0x65] sm:$0x1] %vm420, %v602
        %620 = vst.msk [vmem:[#allocation2 + $0x75] sm:$0x1] %vm420, %v604
        %621 = vrot.lane.b32.xlu0 %v432, 32
        %v622 = vpop.permute.xlu0 %621
        %623 = vrot.lane.b32.xlu0 %v436, 32
        %v624 = vpop.permute.xlu0 %623
        %625 = vrot.lane.b32.xlu0 %v440, 32
        %v626 = vpop.permute.xlu0 %625
        %627 = vrot.lane.b32.xlu0 %v444, 32
        %v628 = vpop.permute.xlu0 %627
        %629 = vrot.lane.b32.xlu0 %v448, 32
        %v630 = vpop.permute.xlu0 %629
        %631 = vrot.lane.b32.xlu0 %v452, 32
        %v632 = vpop.permute.xlu0 %631
        %633 = vrot.lane.b32.xlu0 %v456, 32
        %v634 = vpop.permute.xlu0 %633
        %635 = vrot.lane.b32.xlu0 %v460, 32
        %v636 = vpop.permute.xlu0 %635
        %645 = vst.msk [vmem:[#allocation2 + $0x6] sm:$0x1] %vm420, %v622
        %646 = vst.msk [vmem:[#allocation2 + $0x16] sm:$0x1] %vm420, %v624
        %647 = vst.msk [vmem:[#allocation2 + $0x26] sm:$0x1] %vm420, %v626
        %648 = vst.msk [vmem:[#allocation2 + $0x36] sm:$0x1] %vm420, %v628
        %649 = vst.msk [vmem:[#allocation2 + $0x46] sm:$0x1] %vm420, %v630
        %650 = vst.msk [vmem:[#allocation2 + $0x56] sm:$0x1] %vm420, %v632
        %651 = vst.msk [vmem:[#allocation2 + $0x66] sm:$0x1] %vm420, %v634
        %652 = vst.msk [vmem:[#allocation2 + $0x76] sm:$0x1] %vm420, %v636
        %653 = vrot.lane.b32.xlu0 %v432, 16
        %v654 = vpop.permute.xlu0 %653
        %655 = vrot.lane.b32.xlu0 %v436, 16
        %v656 = vpop.permute.xlu0 %655
        %657 = vrot.lane.b32.xlu0 %v440, 16
        %v658 = vpop.permute.xlu0 %657
        %659 = vrot.lane.b32.xlu0 %v444, 16
        %v660 = vpop.permute.xlu0 %659
        %661 = vrot.lane.b32.xlu0 %v448, 16
        %v662 = vpop.permute.xlu0 %661
        %663 = vrot.lane.b32.xlu0 %v452, 16
        %v664 = vpop.permute.xlu0 %663
        %665 = vrot.lane.b32.xlu0 %v456, 16
        %v666 = vpop.permute.xlu0 %665
        %667 = vrot.lane.b32.xlu0 %v460, 16
        %v668 = vpop.permute.xlu0 %667
        %677 = vst.msk [vmem:[#allocation2 + $0x7] sm:$0x1] %vm420, %v654
        %678 = vst.msk [vmem:[#allocation2 + $0x17] sm:$0x1] %vm420, %v656
        %679 = vst.msk [vmem:[#allocation2 + $0x27] sm:$0x1] %vm420, %v658
        %680 = vst.msk [vmem:[#allocation2 + $0x37] sm:$0x1] %vm420, %v660
        %681 = vst.msk [vmem:[#allocation2 + $0x47] sm:$0x1] %vm420, %v662
        %682 = vst.msk [vmem:[#allocation2 + $0x57] sm:$0x1] %vm420, %v664
        %683 = vst.msk [vmem:[#allocation2 + $0x67] sm:$0x1] %vm420, %v666
        %684 = vst.msk [vmem:[#allocation2 + $0x77] sm:$0x1] %vm420, %v668
        %v686 = vcombine.high %v360, %v360
        %v688 = vunpack.c.l.s4 1966171168
        %v689 = vunpack.c.0.s8 %v688
        %v690 = vlaneseq
        %v691 = vshrl.u32 %v690, 7
        %v692 = vsub.s32 %v689, %v691
        %v693 = vrot.slane %v360, %v692
        %v695 = vunpack.c.l.s4 1966171168
        %v696 = vunpack.c.0.s8 %v695
        %v697 = vlaneseq
        %v698 = vshrl.u32 %v697, 7
        %v699 = vsub.s32 %v696, %v698
        %v700 = vrot.slane %v686, %v699
        %v701 = vcombine.high %v693, %v693
        %v702 = vcombine.high %v700, %v700
        %v704 = vunpack.c.l.s4 1966171168
        %v705 = vunpack.c.0.s8 %v704
        %v706 = vlaneseq
        %v707 = vshrl.u32 %v706, 7
        %v708 = vsub.s32 %v705, %v707
        %v709 = vrot.slane %v693, %v708
        %v711 = vunpack.c.l.s4 1966171168
        %v712 = vunpack.c.0.s8 %v711
        %v713 = vlaneseq
        %v714 = vshrl.u32 %v713, 7
        %v715 = vsub.s32 %v712, %v714
        %v716 = vrot.slane %v700, %v715
        %v718 = vunpack.c.l.s4 1966171168
        %v719 = vunpack.c.0.s8 %v718
        %v720 = vlaneseq
        %v721 = vshrl.u32 %v720, 7
        %v722 = vsub.s32 %v719, %v721
        %v723 = vrot.slane %v701, %v722
        %v725 = vunpack.c.l.s4 1966171168
        %v726 = vunpack.c.0.s8 %v725
        %v727 = vlaneseq
        %v728 = vshrl.u32 %v727, 7
        %v729 = vsub.s32 %v726, %v728
        %v730 = vrot.slane %v702, %v729
        %v731 = vcombine.high %v709, %v709
        %v732 = vcombine.high %v716, %v716
        %v733 = vcombine.high %v723, %v723
        %v734 = vcombine.high %v730, %v730
        %743 = vst.msk [vmem:[#allocation2 + $0x8] sm:$0x1] %vm420, %v709
        %744 = vst.msk [vmem:[#allocation2 + $0x18] sm:$0x1] %vm420, %v723
        %745 = vst.msk [vmem:[#allocation2 + $0x28] sm:$0x1] %vm420, %v731
        %746 = vst.msk [vmem:[#allocation2 + $0x38] sm:$0x1] %vm420, %v733
        %747 = vst.msk [vmem:[#allocation2 + $0x48] sm:$0x1] %vm420, %v716
        %748 = vst.msk [vmem:[#allocation2 + $0x58] sm:$0x1] %vm420, %v730
        %749 = vst.msk [vmem:[#allocation2 + $0x68] sm:$0x1] %vm420, %v732
        %750 = vst.msk [vmem:[#allocation2 + $0x78] sm:$0x1] %vm420, %v734
        %v751 = vlaneseq
        %v752 = vshrl.u32 %v751, 7
        %v753 = vsub.s32 0, %v752
        %v754 = vrot.slane %v709, %v753
        %v755 = vlaneseq
        %v756 = vshrl.u32 %v755, 7
        %v757 = vsub.s32 0, %v756
        %v758 = vrot.slane %v723, %v757
        %v759 = vlaneseq
        %v760 = vshrl.u32 %v759, 7
        %v761 = vsub.s32 0, %v760
        %v762 = vrot.slane %v731, %v761
        %v763 = vlaneseq
        %v764 = vshrl.u32 %v763, 7
        %v765 = vsub.s32 0, %v764
        %v766 = vrot.slane %v733, %v765
        %v767 = vlaneseq
        %v768 = vshrl.u32 %v767, 7
        %v769 = vsub.s32 0, %v768
        %v770 = vrot.slane %v716, %v769
        %v771 = vlaneseq
        %v772 = vshrl.u32 %v771, 7
        %v773 = vsub.s32 0, %v772
        %v774 = vrot.slane %v730, %v773
        %v775 = vlaneseq
        %v776 = vshrl.u32 %v775, 7
        %v777 = vsub.s32 0, %v776
        %v778 = vrot.slane %v732, %v777
        %v779 = vlaneseq
        %v780 = vshrl.u32 %v779, 7
        %v781 = vsub.s32 0, %v780
        %v782 = vrot.slane %v734, %v781
        %783 = vrot.lane.b32.xlu0 %v754, 112
        %v784 = vpop.permute.xlu0 %783
        %785 = vrot.lane.b32.xlu0 %v758, 112
        %v786 = vpop.permute.xlu0 %785
        %787 = vrot.lane.b32.xlu0 %v762, 112
        %v788 = vpop.permute.xlu0 %787
        %789 = vrot.lane.b32.xlu0 %v766, 112
        %v790 = vpop.permute.xlu0 %789
        %791 = vrot.lane.b32.xlu0 %v770, 112
        %v792 = vpop.permute.xlu0 %791
        %793 = vrot.lane.b32.xlu0 %v774, 112
        %v794 = vpop.permute.xlu0 %793
        %795 = vrot.lane.b32.xlu0 %v778, 112
        %v796 = vpop.permute.xlu0 %795
        %797 = vrot.lane.b32.xlu0 %v782, 112
        %v798 = vpop.permute.xlu0 %797
        %807 = vst.msk [vmem:[#allocation2 + $0x9] sm:$0x1] %vm420, %v784
        %808 = vst.msk [vmem:[#allocation2 + $0x19] sm:$0x1] %vm420, %v786
        %809 = vst.msk [vmem:[#allocation2 + $0x29] sm:$0x1] %vm420, %v788
        %810 = vst.msk [vmem:[#allocation2 + $0x39] sm:$0x1] %vm420, %v790
        %811 = vst.msk [vmem:[#allocation2 + $0x49] sm:$0x1] %vm420, %v792
        %812 = vst.msk [vmem:[#allocation2 + $0x59] sm:$0x1] %vm420, %v794
        %813 = vst.msk [vmem:[#allocation2 + $0x69] sm:$0x1] %vm420, %v796
        %814 = vst.msk [vmem:[#allocation2 + $0x79] sm:$0x1] %vm420, %v798
        %815 = vrot.lane.b32.xlu0 %v754, 96
        %v816 = vpop.permute.xlu0 %815
        %817 = vrot.lane.b32.xlu0 %v758, 96
        %v818 = vpop.permute.xlu0 %817
        %819 = vrot.lane.b32.xlu0 %v762, 96
        %v820 = vpop.permute.xlu0 %819
        %821 = vrot.lane.b32.xlu0 %v766, 96
        %v822 = vpop.permute.xlu0 %821
        %823 = vrot.lane.b32.xlu0 %v770, 96
        %v824 = vpop.permute.xlu0 %823
        %825 = vrot.lane.b32.xlu0 %v774, 96
        %v826 = vpop.permute.xlu0 %825
        %827 = vrot.lane.b32.xlu0 %v778, 96
        %v828 = vpop.permute.xlu0 %827
        %829 = vrot.lane.b32.xlu0 %v782, 96
        %v830 = vpop.permute.xlu0 %829
        %839 = vst.msk [vmem:[#allocation2 + $0xa] sm:$0x1] %vm420, %v816
        %840 = vst.msk [vmem:[#allocation2 + $0x1a] sm:$0x1] %vm420, %v818
        %841 = vst.msk [vmem:[#allocation2 + $0x2a] sm:$0x1] %vm420, %v820
        %842 = vst.msk [vmem:[#allocation2 + $0x3a] sm:$0x1] %vm420, %v822
        %843 = vst.msk [vmem:[#allocation2 + $0x4a] sm:$0x1] %vm420, %v824
        %844 = vst.msk [vmem:[#allocation2 + $0x5a] sm:$0x1] %vm420, %v826
        %845 = vst.msk [vmem:[#allocation2 + $0x6a] sm:$0x1] %vm420, %v828
        %846 = vst.msk [vmem:[#allocation2 + $0x7a] sm:$0x1] %vm420, %v830
        %847 = vrot.lane.b32.xlu0 %v754, 80
        %v848 = vpop.permute.xlu0 %847
        %849 = vrot.lane.b32.xlu0 %v758, 80
        %v850 = vpop.permute.xlu0 %849
        %851 = vrot.lane.b32.xlu0 %v762, 80
        %v852 = vpop.permute.xlu0 %851
        %853 = vrot.lane.b32.xlu0 %v766, 80
        %v854 = vpop.permute.xlu0 %853
        %855 = vrot.lane.b32.xlu0 %v770, 80
        %v856 = vpop.permute.xlu0 %855
        %857 = vrot.lane.b32.xlu0 %v774, 80
        %v858 = vpop.permute.xlu0 %857
        %859 = vrot.lane.b32.xlu0 %v778, 80
        %v860 = vpop.permute.xlu0 %859
        %861 = vrot.lane.b32.xlu0 %v782, 80
        %v862 = vpop.permute.xlu0 %861
        %871 = vst.msk [vmem:[#allocation2 + $0xb] sm:$0x1] %vm420, %v848
        %872 = vst.msk [vmem:[#allocation2 + $0x1b] sm:$0x1] %vm420, %v850
        %873 = vst.msk [vmem:[#allocation2 + $0x2b] sm:$0x1] %vm420, %v852
        %874 = vst.msk [vmem:[#allocation2 + $0x3b] sm:$0x1] %vm420, %v854
        %875 = vst.msk [vmem:[#allocation2 + $0x4b] sm:$0x1] %vm420, %v856
        %876 = vst.msk [vmem:[#allocation2 + $0x5b] sm:$0x1] %vm420, %v858
        %877 = vst.msk [vmem:[#allocation2 + $0x6b] sm:$0x1] %vm420, %v860
        %878 = vst.msk [vmem:[#allocation2 + $0x7b] sm:$0x1] %vm420, %v862
        %879 = vrot.lane.b32.xlu0 %v754, 64
        %v880 = vpop.permute.xlu0 %879
        %881 = vrot.lane.b32.xlu0 %v758, 64
        %v882 = vpop.permute.xlu0 %881
        %883 = vrot.lane.b32.xlu0 %v762, 64
        %v884 = vpop.permute.xlu0 %883
        %885 = vrot.lane.b32.xlu0 %v766, 64
        %v886 = vpop.permute.xlu0 %885
        %887 = vrot.lane.b32.xlu0 %v770, 64
        %v888 = vpop.permute.xlu0 %887
        %889 = vrot.lane.b32.xlu0 %v774, 64
        %v890 = vpop.permute.xlu0 %889
        %891 = vrot.lane.b32.xlu0 %v778, 64
        %v892 = vpop.permute.xlu0 %891
        %893 = vrot.lane.b32.xlu0 %v782, 64
        %v894 = vpop.permute.xlu0 %893
        %903 = vst.msk [vmem:[#allocation2 + $0xc] sm:$0x1] %vm420, %v880
        %904 = vst.msk [vmem:[#allocation2 + $0x1c] sm:$0x1] %vm420, %v882
        %905 = vst.msk [vmem:[#allocation2 + $0x2c] sm:$0x1] %vm420, %v884
        %906 = vst.msk [vmem:[#allocation2 + $0x3c] sm:$0x1] %vm420, %v886
        %907 = vst.msk [vmem:[#allocation2 + $0x4c] sm:$0x1] %vm420, %v888
        %908 = vst.msk [vmem:[#allocation2 + $0x5c] sm:$0x1] %vm420, %v890
        %909 = vst.msk [vmem:[#allocation2 + $0x6c] sm:$0x1] %vm420, %v892
        %910 = vst.msk [vmem:[#allocation2 + $0x7c] sm:$0x1] %vm420, %v894
        %911 = vrot.lane.b32.xlu0 %v754, 48
        %v912 = vpop.permute.xlu0 %911
        %913 = vrot.lane.b32.xlu0 %v758, 48
        %v914 = vpop.permute.xlu0 %913
        %915 = vrot.lane.b32.xlu0 %v762, 48
        %v916 = vpop.permute.xlu0 %915
        %917 = vrot.lane.b32.xlu0 %v766, 48
        %v918 = vpop.permute.xlu0 %917
        %919 = vrot.lane.b32.xlu0 %v770, 48
        %v920 = vpop.permute.xlu0 %919
        %921 = vrot.lane.b32.xlu0 %v774, 48
        %v922 = vpop.permute.xlu0 %921
        %923 = vrot.lane.b32.xlu0 %v778, 48
        %v924 = vpop.permute.xlu0 %923
        %925 = vrot.lane.b32.xlu0 %v782, 48
        %v926 = vpop.permute.xlu0 %925
        %935 = vst.msk [vmem:[#allocation2 + $0xd] sm:$0x1] %vm420, %v912
        %936 = vst.msk [vmem:[#allocation2 + $0x1d] sm:$0x1] %vm420, %v914
        %937 = vst.msk [vmem:[#allocation2 + $0x2d] sm:$0x1] %vm420, %v916
        %938 = vst.msk [vmem:[#allocation2 + $0x3d] sm:$0x1] %vm420, %v918
        %939 = vst.msk [vmem:[#allocation2 + $0x4d] sm:$0x1] %vm420, %v920
        %940 = vst.msk [vmem:[#allocation2 + $0x5d] sm:$0x1] %vm420, %v922
        %941 = vst.msk [vmem:[#allocation2 + $0x6d] sm:$0x1] %vm420, %v924
        %942 = vst.msk [vmem:[#allocation2 + $0x7d] sm:$0x1] %vm420, %v926
        %943 = vrot.lane.b32.xlu0 %v754, 32
        %v944 = vpop.permute.xlu0 %943
        %945 = vrot.lane.b32.xlu0 %v758, 32
        %v946 = vpop.permute.xlu0 %945
        %947 = vrot.lane.b32.xlu0 %v762, 32
        %v948 = vpop.permute.xlu0 %947
        %949 = vrot.lane.b32.xlu0 %v766, 32
        %v950 = vpop.permute.xlu0 %949
        %951 = vrot.lane.b32.xlu0 %v770, 32
        %v952 = vpop.permute.xlu0 %951
        %953 = vrot.lane.b32.xlu0 %v774, 32
        %v954 = vpop.permute.xlu0 %953
        %955 = vrot.lane.b32.xlu0 %v778, 32
        %v956 = vpop.permute.xlu0 %955
        %957 = vrot.lane.b32.xlu0 %v782, 32
        %v958 = vpop.permute.xlu0 %957
        %967 = vst.msk [vmem:[#allocation2 + $0xe] sm:$0x1] %vm420, %v944
        %968 = vst.msk [vmem:[#allocation2 + $0x1e] sm:$0x1] %vm420, %v946
        %969 = vst.msk [vmem:[#allocation2 + $0x2e] sm:$0x1] %vm420, %v948
        %970 = vst.msk [vmem:[#allocation2 + $0x3e] sm:$0x1] %vm420, %v950
        %971 = vst.msk [vmem:[#allocation2 + $0x4e] sm:$0x1] %vm420, %v952
        %972 = vst.msk [vmem:[#allocation2 + $0x5e] sm:$0x1] %vm420, %v954
        %973 = vst.msk [vmem:[#allocation2 + $0x6e] sm:$0x1] %vm420, %v956
        %974 = vst.msk [vmem:[#allocation2 + $0x7e] sm:$0x1] %vm420, %v958
        %975 = vrot.lane.b32.xlu0 %v754, 16
        %v976 = vpop.permute.xlu0 %975
        %977 = vrot.lane.b32.xlu0 %v758, 16
        %v978 = vpop.permute.xlu0 %977
        %979 = vrot.lane.b32.xlu0 %v762, 16
        %v980 = vpop.permute.xlu0 %979
        %981 = vrot.lane.b32.xlu0 %v766, 16
        %v982 = vpop.permute.xlu0 %981
        %983 = vrot.lane.b32.xlu0 %v770, 16
        %v984 = vpop.permute.xlu0 %983
        %985 = vrot.lane.b32.xlu0 %v774, 16
        %v986 = vpop.permute.xlu0 %985
        %987 = vrot.lane.b32.xlu0 %v778, 16
        %v988 = vpop.permute.xlu0 %987
        %989 = vrot.lane.b32.xlu0 %v782, 16
        %v990 = vpop.permute.xlu0 %989
        %999 = vst.msk [vmem:[#allocation2 + $0xf] sm:$0x1] %vm420, %v976
        %1000 = vst.msk [vmem:[#allocation2 + $0x1f] sm:$0x1] %vm420, %v978
        %1001 = vst.msk [vmem:[#allocation2 + $0x2f] sm:$0x1] %vm420, %v980
        %1002 = vst.msk [vmem:[#allocation2 + $0x3f] sm:$0x1] %vm420, %v982
        %1003 = vst.msk [vmem:[#allocation2 + $0x4f] sm:$0x1] %vm420, %v984
        %1004 = vst.msk [vmem:[#allocation2 + $0x5f] sm:$0x1] %vm420, %v986
        %1005 = vst.msk [vmem:[#allocation2 + $0x6f] sm:$0x1] %vm420, %v988
        %1006 = vst.msk [vmem:[#allocation2 + $0x7f] sm:$0x1] %vm420, %v990
        %v1007 = vld [vmem:[#allocation2] sm:$0xff]
        %v1008 = vld [vmem:[#allocation2 + $0x8] sm:$0xff]
        %v1009 = vld [vmem:[#allocation2 + $0x10] sm:$0xff]
        %v1010 = vld [vmem:[#allocation2 + $0x18] sm:$0xff]
        %v1011 = vld [vmem:[#allocation2 + $0x20] sm:$0xff]
        %v1012 = vld [vmem:[#allocation2 + $0x28] sm:$0xff]
        %v1013 = vld [vmem:[#allocation2 + $0x30] sm:$0xff]
        %v1014 = vld [vmem:[#allocation2 + $0x38] sm:$0xff]
        %v1015 = vld [vmem:[#allocation2 + $0x40] sm:$0xff]
        %v1016 = vld [vmem:[#allocation2 + $0x48] sm:$0xff]
        %v1017 = vld [vmem:[#allocation2 + $0x50] sm:$0xff]
        %v1018 = vld [vmem:[#allocation2 + $0x58] sm:$0xff]
        %v1019 = vld [vmem:[#allocation2 + $0x60] sm:$0xff]
        %v1020 = vld [vmem:[#allocation2 + $0x68] sm:$0xff]
        %v1021 = vld [vmem:[#allocation2 + $0x70] sm:$0xff]
        %v1022 = vld [vmem:[#allocation2 + $0x78] sm:$0xff]
        %v1023 = vld [vmem:[%s2] sm:$0xff]
        %v1024 = vld [vmem:[%s2 + $0x8] sm:$0xff]
        %v1025 = vld [vmem:[%s2 + $0x10] sm:$0xff]
        %v1026 = vld [vmem:[%s2 + $0x18] sm:$0xff]
        %vm1027 = vcmask 130048
        %v1029 = vsel %vm1027, %v1023, 0
        %v1032 = vsel %vm1027, %v1024, 0
        %v1035 = vsel %vm1027, %v1025, 0
        %v1038 = vsel %vm1027, %v1026, 0
        %1040 = vmatprep.subr.mxu0 0.0
        %1041 = vmatpush1.msra.mxu0 0.0
        %1042 = vmatprep.subr.mxu0 0.0
        %1043 = vmatpush1.msra.mxu0 0.0
        %1044 = vmatprep.subr.mxu0 0.0
        %1045 = vmatpush1.msra.mxu0 0.0
        %1046 = vmatprep.subr.mxu0 0.0
        %1047 = vmatpush1.msra.mxu0 0.0
        %1048 = vmatprep.subr.mxu0 0.0
        %1049 = vmatpush1.msra.mxu0 0.0
        %1050 = vmatprep.subr.mxu0 0.0
        %1051 = vmatpush1.msra.mxu0 0.0
        %1052 = vmatprep.subr.mxu0 0.0
        %1053 = vmatpush1.msra.mxu0 0.0
        %1054 = vmatprep.subr.mxu0 0.0
        %1055 = vmatpush1.msra.mxu0 0.0
        %1056 = vmatprep.subr.mxu0 0.0
        %1057 = vmatpush1.msra.mxu0 0.0
        %1058 = vmatprep.subr.mxu0 0.0
        %1059 = vmatpush1.msra.mxu0 0.0
        %1060 = vmatprep.subr.mxu0 0.0
        %1061 = vmatpush1.msra.mxu0 0.0
        %1062 = vmatprep.subr.mxu0 0.0
        %1063 = vmatpush1.msra.mxu0 0.0
        %1064 = vmatprep.subr.mxu0 0.0
        %1065 = vmatpush1.msra.mxu0 0.0
        %1066 = vmatprep.subr.mxu0 0.0
        %1067 = vmatpush1.msra.mxu0 0.0
        %1068 = vmatprep.subr.mxu0 0.0
        %1069 = vmatpush1.msra.mxu0 %v1008
        %1070 = vmatprep.subr.mxu0 0.0
        %1071 = vmatpush1.msra.mxu0 %v1007
        %1072 = vmatprep.subr.mxu0 0.0
        %1073 = vmatpush2.msra.mxu0 0.0
        %1074 = vmatprep.subr.mxu0 0.0
        %1075 = vmatpush2.msra.mxu0 0.0
        %1076 = vmatprep.subr.mxu0 0.0
        %1077 = vmatpush2.msra.mxu0 0.0
        %1078 = vmatprep.subr.mxu0 0.0
        %1079 = vmatpush2.msra.mxu0 0.0
        %1080 = vmatprep.subr.mxu0 0.0
        %1081 = vmatpush2.msra.mxu0 0.0
        %1082 = vmatprep.subr.mxu0 0.0
        %1083 = vmatpush2.msra.mxu0 0.0
        %1084 = vmatprep.subr.mxu0 0.0
        %1085 = vmatpush2.msra.mxu0 0.0
        %1086 = vmatprep.subr.mxu0 0.0
        %1087 = vmatpush2.msra.mxu0 0.0
        %1088 = vmatprep.subr.mxu0 0.0
        %1089 = vmatpush2.msra.mxu0 0.0
        %1090 = vmatprep.subr.mxu0 0.0
        %1091 = vmatpush2.msra.mxu0 0.0
        %1092 = vmatprep.subr.mxu0 0.0
        %1093 = vmatpush2.msra.mxu0 0.0
        %1094 = vmatprep.subr.mxu0 0.0
        %1095 = vmatpush2.msra.mxu0 0.0
        %1096 = vmatprep.subr.mxu0 0.0
        %1097 = vmatpush2.msra.mxu0 0.0
        %1098 = vmatprep.subr.mxu0 0.0
        %1099 = vmatpush2.msra.mxu0 0.0
        %1100 = vmatprep.subr.mxu0 0.0
        %1101 = vmatpush2.msra.mxu0 0.0
        %1102 = vmatprep.subr.mxu0 0.0
        %1103 = vmatpush2.msra.mxu0 0.0
        %1104 = vmatprep.mubr.f32.mxu0 0.0
        %1105 = vmatmul.mubr.f32.gmra.mxu0 %v1029
        %v1106 = vpop.f32.mrf.mxu0
        %v1107 = vadd.f32 0.0, %v1106
        %v1108 = vpop.f32.mrf.mxu0
        %1109 = vmatprep.mubr.f32.mxu0 0.0
        %1110 = vmatmul.mubr.f32.gmra.mxu0 %v1032
        %v1111 = vpop.f32.mrf.mxu0
        %v1112 = vadd.f32 0.0, %v1111
        %v1113 = vpop.f32.mrf.mxu0
        %1114 = vmatprep.mubr.f32.mxu0 0.0
        %1115 = vmatmul.mubr.f32.gmra.mxu0 %v1035
        %v1116 = vpop.f32.mrf.mxu0
        %v1117 = vadd.f32 0.0, %v1116
        %v1118 = vpop.f32.mrf.mxu0
        %1119 = vmatprep.mubr.f32.mxu0 0.0
        %1120 = vmatmul.mubr.f32.gmra.mxu0 %v1038
        %v1121 = vpop.f32.mrf.mxu0
        %v1122 = vadd.f32 0.0, %v1121
        %v1123 = vpop.f32.mrf.mxu0
        %1124 = vdwg.mxu0
        %1125 = vmatprep.subr.mxu0 0.0
        %1126 = vmatpush1.msra.mxu0 0.0
        %1127 = vmatprep.subr.mxu0 0.0
        %1128 = vmatpush1.msra.mxu0 0.0
        %1129 = vmatprep.subr.mxu0 0.0
        %1130 = vmatpush1.msra.mxu0 0.0
        %1131 = vmatprep.subr.mxu0 0.0
        %1132 = vmatpush1.msra.mxu0 0.0
        %1133 = vmatprep.subr.mxu0 0.0
        %1134 = vmatpush1.msra.mxu0 0.0
        %1135 = vmatprep.subr.mxu0 0.0
        %1136 = vmatpush1.msra.mxu0 0.0
        %1137 = vmatprep.subr.mxu0 0.0
        %1138 = vmatpush1.msra.mxu0 0.0
        %1139 = vmatprep.subr.mxu0 0.0
        %1140 = vmatpush1.msra.mxu0 0.0
        %1141 = vmatprep.subr.mxu0 0.0
        %1142 = vmatpush1.msra.mxu0 0.0
        %1143 = vmatprep.subr.mxu0 0.0
        %1144 = vmatpush1.msra.mxu0 0.0
        %1145 = vmatprep.subr.mxu0 0.0
        %1146 = vmatpush1.msra.mxu0 0.0
        %1147 = vmatprep.subr.mxu0 0.0
        %1148 = vmatpush1.msra.mxu0 0.0
        %1149 = vmatprep.subr.mxu0 0.0
        %1150 = vmatpush1.msra.mxu0 0.0
        %1151 = vmatprep.subr.mxu0 0.0
        %1152 = vmatpush1.msra.mxu0 0.0
        %1153 = vmatprep.subr.mxu0 0.0
        %1154 = vmatpush1.msra.mxu0 %v1010
        %1155 = vmatprep.subr.mxu0 0.0
        %1156 = vmatpush1.msra.mxu0 %v1009
        %1157 = vmatprep.subr.mxu0 0.0
        %1158 = vmatpush2.msra.mxu0 0.0
        %1159 = vmatprep.subr.mxu0 0.0
        %1160 = vmatpush2.msra.mxu0 0.0
        %1161 = vmatprep.subr.mxu0 0.0
        %1162 = vmatpush2.msra.mxu0 0.0
        %1163 = vmatprep.subr.mxu0 0.0
        %1164 = vmatpush2.msra.mxu0 0.0
        %1165 = vmatprep.subr.mxu0 0.0
        %1166 = vmatpush2.msra.mxu0 0.0
        %1167 = vmatprep.subr.mxu0 0.0
        %1168 = vmatpush2.msra.mxu0 0.0
        %1169 = vmatprep.subr.mxu0 0.0
        %1170 = vmatpush2.msra.mxu0 0.0
        %1171 = vmatprep.subr.mxu0 0.0
        %1172 = vmatpush2.msra.mxu0 0.0
        %1173 = vmatprep.subr.mxu0 0.0
        %1174 = vmatpush2.msra.mxu0 0.0
        %1175 = vmatprep.subr.mxu0 0.0
        %1176 = vmatpush2.msra.mxu0 0.0
        %1177 = vmatprep.subr.mxu0 0.0
        %1178 = vmatpush2.msra.mxu0 0.0
        %1179 = vmatprep.subr.mxu0 0.0
        %1180 = vmatpush2.msra.mxu0 0.0
        %1181 = vmatprep.subr.mxu0 0.0
        %1182 = vmatpush2.msra.mxu0 0.0
        %1183 = vmatprep.subr.mxu0 0.0
        %1184 = vmatpush2.msra.mxu0 0.0
        %1185 = vmatprep.subr.mxu0 0.0
        %1186 = vmatpush2.msra.mxu0 0.0
        %1187 = vmatprep.subr.mxu0 0.0
        %1188 = vmatpush2.msra.mxu0 0.0
        %1189 = vmatprep.mubr.f32.mxu0 0.0
        %1190 = vmatmul.mubr.f32.gmra.mxu0 %v1029
        %v1191 = vpop.f32.mrf.mxu0
        %v1192 = vadd.f32 0.0, %v1191
        %v1193 = vpop.f32.mrf.mxu0
        %1194 = vmatprep.mubr.f32.mxu0 0.0
        %1195 = vmatmul.mubr.f32.gmra.mxu0 %v1032
        %v1196 = vpop.f32.mrf.mxu0
        %v1197 = vadd.f32 0.0, %v1196
        %v1198 = vpop.f32.mrf.mxu0
        %1199 = vmatprep.mubr.f32.mxu0 0.0
        %1200 = vmatmul.mubr.f32.gmra.mxu0 %v1035
        %v1201 = vpop.f32.mrf.mxu0
        %v1202 = vadd.f32 0.0, %v1201
        %v1203 = vpop.f32.mrf.mxu0
        %1204 = vmatprep.mubr.f32.mxu0 0.0
        %1205 = vmatmul.mubr.f32.gmra.mxu0 %v1038
        %v1206 = vpop.f32.mrf.mxu0
        %v1207 = vadd.f32 0.0, %v1206
        %v1208 = vpop.f32.mrf.mxu0
        %1209 = vdwg.mxu0
        %1210 = vmatprep.subr.mxu0 0.0
        %1211 = vmatpush1.msra.mxu0 0.0
        %1212 = vmatprep.subr.mxu0 0.0
        %1213 = vmatpush1.msra.mxu0 0.0
        %1214 = vmatprep.subr.mxu0 0.0
        %1215 = vmatpush1.msra.mxu0 0.0
        %1216 = vmatprep.subr.mxu0 0.0
        %1217 = vmatpush1.msra.mxu0 0.0
        %1218 = vmatprep.subr.mxu0 0.0
        %1219 = vmatpush1.msra.mxu0 0.0
        %1220 = vmatprep.subr.mxu0 0.0
        %1221 = vmatpush1.msra.mxu0 0.0
        %1222 = vmatprep.subr.mxu0 0.0
        %1223 = vmatpush1.msra.mxu0 0.0
        %1224 = vmatprep.subr.mxu0 0.0
        %1225 = vmatpush1.msra.mxu0 0.0
        %1226 = vmatprep.subr.mxu0 0.0
        %1227 = vmatpush1.msra.mxu0 0.0
        %1228 = vmatprep.subr.mxu0 0.0
        %1229 = vmatpush1.msra.mxu0 0.0
        %1230 = vmatprep.subr.mxu0 0.0
        %1231 = vmatpush1.msra.mxu0 0.0
        %1232 = vmatprep.subr.mxu0 0.0
        %1233 = vmatpush1.msra.mxu0 0.0
        %1234 = vmatprep.subr.mxu0 0.0
        %1235 = vmatpush1.msra.mxu0 0.0
        %1236 = vmatprep.subr.mxu0 0.0
        %1237 = vmatpush1.msra.mxu0 0.0
        %1238 = vmatprep.subr.mxu0 0.0
        %1239 = vmatpush1.msra.mxu0 %v1012
        %1240 = vmatprep.subr.mxu0 0.0
        %1241 = vmatpush1.msra.mxu0 %v1011
        %1242 = vmatprep.subr.mxu0 0.0
        %1243 = vmatpush2.msra.mxu0 0.0
        %1244 = vmatprep.subr.mxu0 0.0
        %1245 = vmatpush2.msra.mxu0 0.0
        %1246 = vmatprep.subr.mxu0 0.0
        %1247 = vmatpush2.msra.mxu0 0.0
        %1248 = vmatprep.subr.mxu0 0.0
        %1249 = vmatpush2.msra.mxu0 0.0
        %1250 = vmatprep.subr.mxu0 0.0
        %1251 = vmatpush2.msra.mxu0 0.0
        %1252 = vmatprep.subr.mxu0 0.0
        %1253 = vmatpush2.msra.mxu0 0.0
        %1254 = vmatprep.subr.mxu0 0.0
        %1255 = vmatpush2.msra.mxu0 0.0
        %1256 = vmatprep.subr.mxu0 0.0
        %1257 = vmatpush2.msra.mxu0 0.0
        %1258 = vmatprep.subr.mxu0 0.0
        %1259 = vmatpush2.msra.mxu0 0.0
        %1260 = vmatprep.subr.mxu0 0.0
        %1261 = vmatpush2.msra.mxu0 0.0
        %1262 = vmatprep.subr.mxu0 0.0
        %1263 = vmatpush2.msra.mxu0 0.0
        %1264 = vmatprep.subr.mxu0 0.0
        %1265 = vmatpush2.msra.mxu0 0.0
        %1266 = vmatprep.subr.mxu0 0.0
        %1267 = vmatpush2.msra.mxu0 0.0
        %1268 = vmatprep.subr.mxu0 0.0
        %1269 = vmatpush2.msra.mxu0 0.0
        %1270 = vmatprep.subr.mxu0 0.0
        %1271 = vmatpush2.msra.mxu0 0.0
        %1272 = vmatprep.subr.mxu0 0.0
        %1273 = vmatpush2.msra.mxu0 0.0
        %1274 = vmatprep.mubr.f32.mxu0 0.0
        %1275 = vmatmul.mubr.f32.gmra.mxu0 %v1029
        %v1276 = vpop.f32.mrf.mxu0
        %v1277 = vadd.f32 0.0, %v1276
        %v1278 = vpop.f32.mrf.mxu0
        %1279 = vmatprep.mubr.f32.mxu0 0.0
        %1280 = vmatmul.mubr.f32.gmra.mxu0 %v1032
        %v1281 = vpop.f32.mrf.mxu0
        %v1282 = vadd.f32 0.0, %v1281
        %v1283 = vpop.f32.mrf.mxu0
        %1284 = vmatprep.mubr.f32.mxu0 0.0
        %1285 = vmatmul.mubr.f32.gmra.mxu0 %v1035
        %v1286 = vpop.f32.mrf.mxu0
        %v1287 = vadd.f32 0.0, %v1286
        %v1288 = vpop.f32.mrf.mxu0
        %1289 = vmatprep.mubr.f32.mxu0 0.0
        %1290 = vmatmul.mubr.f32.gmra.mxu0 %v1038
        %v1291 = vpop.f32.mrf.mxu0
        %v1292 = vadd.f32 0.0, %v1291
        %v1293 = vpop.f32.mrf.mxu0
        %1294 = vdwg.mxu0
        %1295 = vmatprep.subr.mxu0 0.0
        %1296 = vmatpush1.msra.mxu0 0.0
        %1297 = vmatprep.subr.mxu0 0.0
        %1298 = vmatpush1.msra.mxu0 0.0
        %1299 = vmatprep.subr.mxu0 0.0
        %1300 = vmatpush1.msra.mxu0 0.0
        %1301 = vmatprep.subr.mxu0 0.0
        %1302 = vmatpush1.msra.mxu0 0.0
        %1303 = vmatprep.subr.mxu0 0.0
        %1304 = vmatpush1.msra.mxu0 0.0
        %1305 = vmatprep.subr.mxu0 0.0
        %1306 = vmatpush1.msra.mxu0 0.0
        %1307 = vmatprep.subr.mxu0 0.0
        %1308 = vmatpush1.msra.mxu0 0.0
        %1309 = vmatprep.subr.mxu0 0.0
        %1310 = vmatpush1.msra.mxu0 0.0
        %1311 = vmatprep.subr.mxu0 0.0
        %1312 = vmatpush1.msra.mxu0 0.0
        %1313 = vmatprep.subr.mxu0 0.0
        %1314 = vmatpush1.msra.mxu0 0.0
        %1315 = vmatprep.subr.mxu0 0.0
        %1316 = vmatpush1.msra.mxu0 0.0
        %1317 = vmatprep.subr.mxu0 0.0
        %1318 = vmatpush1.msra.mxu0 0.0
        %1319 = vmatprep.subr.mxu0 0.0
        %1320 = vmatpush1.msra.mxu0 0.0
        %1321 = vmatprep.subr.mxu0 0.0
        %1322 = vmatpush1.msra.mxu0 0.0
        %1323 = vmatprep.subr.mxu0 0.0
        %1324 = vmatpush1.msra.mxu0 %v1014
        %1325 = vmatprep.subr.mxu0 0.0
        %1326 = vmatpush1.msra.mxu0 %v1013
        %1327 = vmatprep.subr.mxu0 0.0
        %1328 = vmatpush2.msra.mxu0 0.0
        %1329 = vmatprep.subr.mxu0 0.0
        %1330 = vmatpush2.msra.mxu0 0.0
        %1331 = vmatprep.subr.mxu0 0.0
        %1332 = vmatpush2.msra.mxu0 0.0
        %1333 = vmatprep.subr.mxu0 0.0
        %1334 = vmatpush2.msra.mxu0 0.0
        %1335 = vmatprep.subr.mxu0 0.0
        %1336 = vmatpush2.msra.mxu0 0.0
        %1337 = vmatprep.subr.mxu0 0.0
        %1338 = vmatpush2.msra.mxu0 0.0
        %1339 = vmatprep.subr.mxu0 0.0
        %1340 = vmatpush2.msra.mxu0 0.0
        %1341 = vmatprep.subr.mxu0 0.0
        %1342 = vmatpush2.msra.mxu0 0.0
        %1343 = vmatprep.subr.mxu0 0.0
        %1344 = vmatpush2.msra.mxu0 0.0
        %1345 = vmatprep.subr.mxu0 0.0
        %1346 = vmatpush2.msra.mxu0 0.0
        %1347 = vmatprep.subr.mxu0 0.0
        %1348 = vmatpush2.msra.mxu0 0.0
        %1349 = vmatprep.subr.mxu0 0.0
        %1350 = vmatpush2.msra.mxu0 0.0
        %1351 = vmatprep.subr.mxu0 0.0
        %1352 = vmatpush2.msra.mxu0 0.0
        %1353 = vmatprep.subr.mxu0 0.0
        %1354 = vmatpush2.msra.mxu0 0.0
        %1355 = vmatprep.subr.mxu0 0.0
        %1356 = vmatpush2.msra.mxu0 0.0
        %1357 = vmatprep.subr.mxu0 0.0
        %1358 = vmatpush2.msra.mxu0 0.0
        %1359 = vmatprep.mubr.f32.mxu0 0.0
        %1360 = vmatmul.mubr.f32.gmra.mxu0 %v1029
        %v1361 = vpop.f32.mrf.mxu0
        %v1362 = vadd.f32 0.0, %v1361
        %v1363 = vpop.f32.mrf.mxu0
        %1364 = vmatprep.mubr.f32.mxu0 0.0
        %1365 = vmatmul.mubr.f32.gmra.mxu0 %v1032
        %v1366 = vpop.f32.mrf.mxu0
        %v1367 = vadd.f32 0.0, %v1366
        %v1368 = vpop.f32.mrf.mxu0
        %1369 = vmatprep.mubr.f32.mxu0 0.0
        %1370 = vmatmul.mubr.f32.gmra.mxu0 %v1035
        %v1371 = vpop.f32.mrf.mxu0
        %v1372 = vadd.f32 0.0, %v1371
        %v1373 = vpop.f32.mrf.mxu0
        %1374 = vmatprep.mubr.f32.mxu0 0.0
        %1375 = vmatmul.mubr.f32.gmra.mxu0 %v1038
        %v1376 = vpop.f32.mrf.mxu0
        %v1377 = vadd.f32 0.0, %v1376
        %v1378 = vpop.f32.mrf.mxu0
        %1379 = vdwg.mxu0
        %1380 = vmatprep.subr.mxu0 0.0
        %1381 = vmatpush1.msra.mxu0 0.0
        %1382 = vmatprep.subr.mxu0 0.0
        %1383 = vmatpush1.msra.mxu0 0.0
        %1384 = vmatprep.subr.mxu0 0.0
        %1385 = vmatpush1.msra.mxu0 0.0
        %1386 = vmatprep.subr.mxu0 0.0
        %1387 = vmatpush1.msra.mxu0 0.0
        %1388 = vmatprep.subr.mxu0 0.0
        %1389 = vmatpush1.msra.mxu0 0.0
        %1390 = vmatprep.subr.mxu0 0.0
        %1391 = vmatpush1.msra.mxu0 0.0
        %1392 = vmatprep.subr.mxu0 0.0
        %1393 = vmatpush1.msra.mxu0 0.0
        %1394 = vmatprep.subr.mxu0 0.0
        %1395 = vmatpush1.msra.mxu0 0.0
        %1396 = vmatprep.subr.mxu0 0.0
        %1397 = vmatpush1.msra.mxu0 0.0
        %1398 = vmatprep.subr.mxu0 0.0
        %1399 = vmatpush1.msra.mxu0 0.0
        %1400 = vmatprep.subr.mxu0 0.0
        %1401 = vmatpush1.msra.mxu0 0.0
        %1402 = vmatprep.subr.mxu0 0.0
        %1403 = vmatpush1.msra.mxu0 0.0
        %1404 = vmatprep.subr.mxu0 0.0
        %1405 = vmatpush1.msra.mxu0 0.0
        %1406 = vmatprep.subr.mxu0 0.0
        %1407 = vmatpush1.msra.mxu0 0.0
        %1408 = vmatprep.subr.mxu0 0.0
        %1409 = vmatpush1.msra.mxu0 %v1016
        %1410 = vmatprep.subr.mxu0 0.0
        %1411 = vmatpush1.msra.mxu0 %v1015
        %1412 = vmatprep.subr.mxu0 0.0
        %1413 = vmatpush2.msra.mxu0 0.0
        %1414 = vmatprep.subr.mxu0 0.0
        %1415 = vmatpush2.msra.mxu0 0.0
        %1416 = vmatprep.subr.mxu0 0.0
        %1417 = vmatpush2.msra.mxu0 0.0
        %1418 = vmatprep.subr.mxu0 0.0
        %1419 = vmatpush2.msra.mxu0 0.0
        %1420 = vmatprep.subr.mxu0 0.0
        %1421 = vmatpush2.msra.mxu0 0.0
        %1422 = vmatprep.subr.mxu0 0.0
        %1423 = vmatpush2.msra.mxu0 0.0
        %1424 = vmatprep.subr.mxu0 0.0
        %1425 = vmatpush2.msra.mxu0 0.0
        %1426 = vmatprep.subr.mxu0 0.0
        %1427 = vmatpush2.msra.mxu0 0.0
        %1428 = vmatprep.subr.mxu0 0.0
        %1429 = vmatpush2.msra.mxu0 0.0
        %1430 = vmatprep.subr.mxu0 0.0
        %1431 = vmatpush2.msra.mxu0 0.0
        %1432 = vmatprep.subr.mxu0 0.0
        %1433 = vmatpush2.msra.mxu0 0.0
        %1434 = vmatprep.subr.mxu0 0.0
        %1435 = vmatpush2.msra.mxu0 0.0
        %1436 = vmatprep.subr.mxu0 0.0
        %1437 = vmatpush2.msra.mxu0 0.0
        %1438 = vmatprep.subr.mxu0 0.0
        %1439 = vmatpush2.msra.mxu0 0.0
        %1440 = vmatprep.subr.mxu0 0.0
        %1441 = vmatpush2.msra.mxu0 0.0
        %1442 = vmatprep.subr.mxu0 0.0
        %1443 = vmatpush2.msra.mxu0 0.0
        %1444 = vmatprep.mubr.f32.mxu0 0.0
        %1445 = vmatmul.mubr.f32.gmra.mxu0 %v1029
        %v1446 = vpop.f32.mrf.mxu0
        %v1447 = vadd.f32 0.0, %v1446
        %v1448 = vpop.f32.mrf.mxu0
        %1449 = vmatprep.mubr.f32.mxu0 0.0
        %1450 = vmatmul.mubr.f32.gmra.mxu0 %v1032
        %v1451 = vpop.f32.mrf.mxu0
        %v1452 = vadd.f32 0.0, %v1451
        %v1453 = vpop.f32.mrf.mxu0
        %1454 = vmatprep.mubr.f32.mxu0 0.0
        %1455 = vmatmul.mubr.f32.gmra.mxu0 %v1035
        %v1456 = vpop.f32.mrf.mxu0
        %v1457 = vadd.f32 0.0, %v1456
        %v1458 = vpop.f32.mrf.mxu0
        %1459 = vmatprep.mubr.f32.mxu0 0.0
        %1460 = vmatmul.mubr.f32.gmra.mxu0 %v1038
        %v1461 = vpop.f32.mrf.mxu0
        %v1462 = vadd.f32 0.0, %v1461
        %v1463 = vpop.f32.mrf.mxu0
        %1464 = vdwg.mxu0
        %1465 = vmatprep.subr.mxu0 0.0
        %1466 = vmatpush1.msra.mxu0 0.0
        %1467 = vmatprep.subr.mxu0 0.0
        %1468 = vmatpush1.msra.mxu0 0.0
        %1469 = vmatprep.subr.mxu0 0.0
        %1470 = vmatpush1.msra.mxu0 0.0
        %1471 = vmatprep.subr.mxu0 0.0
        %1472 = vmatpush1.msra.mxu0 0.0
        %1473 = vmatprep.subr.mxu0 0.0
        %1474 = vmatpush1.msra.mxu0 0.0
        %1475 = vmatprep.subr.mxu0 0.0
        %1476 = vmatpush1.msra.mxu0 0.0
        %1477 = vmatprep.subr.mxu0 0.0
        %1478 = vmatpush1.msra.mxu0 0.0
        %1479 = vmatprep.subr.mxu0 0.0
        %1480 = vmatpush1.msra.mxu0 0.0
        %1481 = vmatprep.subr.mxu0 0.0
        %1482 = vmatpush1.msra.mxu0 0.0
        %1483 = vmatprep.subr.mxu0 0.0
        %1484 = vmatpush1.msra.mxu0 0.0
        %1485 = vmatprep.subr.mxu0 0.0
        %1486 = vmatpush1.msra.mxu0 0.0
        %1487 = vmatprep.subr.mxu0 0.0
        %1488 = vmatpush1.msra.mxu0 0.0
        %1489 = vmatprep.subr.mxu0 0.0
        %1490 = vmatpush1.msra.mxu0 0.0
        %1491 = vmatprep.subr.mxu0 0.0
        %1492 = vmatpush1.msra.mxu0 0.0
        %1493 = vmatprep.subr.mxu0 0.0
        %1494 = vmatpush1.msra.mxu0 %v1018
        %1495 = vmatprep.subr.mxu0 0.0
        %1496 = vmatpush1.msra.mxu0 %v1017
        %1497 = vmatprep.subr.mxu0 0.0
        %1498 = vmatpush2.msra.mxu0 0.0
        %1499 = vmatprep.subr.mxu0 0.0
        %1500 = vmatpush2.msra.mxu0 0.0
        %1501 = vmatprep.subr.mxu0 0.0
        %1502 = vmatpush2.msra.mxu0 0.0
        %1503 = vmatprep.subr.mxu0 0.0
        %1504 = vmatpush2.msra.mxu0 0.0
        %1505 = vmatprep.subr.mxu0 0.0
        %1506 = vmatpush2.msra.mxu0 0.0
        %1507 = vmatprep.subr.mxu0 0.0
        %1508 = vmatpush2.msra.mxu0 0.0
        %1509 = vmatprep.subr.mxu0 0.0
        %1510 = vmatpush2.msra.mxu0 0.0
        %1511 = vmatprep.subr.mxu0 0.0
        %1512 = vmatpush2.msra.mxu0 0.0
        %1513 = vmatprep.subr.mxu0 0.0
        %1514 = vmatpush2.msra.mxu0 0.0
        %1515 = vmatprep.subr.mxu0 0.0
        %1516 = vmatpush2.msra.mxu0 0.0
        %1517 = vmatprep.subr.mxu0 0.0
        %1518 = vmatpush2.msra.mxu0 0.0
        %1519 = vmatprep.subr.mxu0 0.0
        %1520 = vmatpush2.msra.mxu0 0.0
        %1521 = vmatprep.subr.mxu0 0.0
        %1522 = vmatpush2.msra.mxu0 0.0
        %1523 = vmatprep.subr.mxu0 0.0
        %1524 = vmatpush2.msra.mxu0 0.0
        %1525 = vmatprep.subr.mxu0 0.0
        %1526 = vmatpush2.msra.mxu0 0.0
        %1527 = vmatprep.subr.mxu0 0.0
        %1528 = vmatpush2.msra.mxu0 0.0
        %1529 = vmatprep.mubr.f32.mxu0 0.0
        %1530 = vmatmul.mubr.f32.gmra.mxu0 %v1029
        %v1531 = vpop.f32.mrf.mxu0
        %v1532 = vadd.f32 0.0, %v1531
        %v1533 = vpop.f32.mrf.mxu0
        %1534 = vmatprep.mubr.f32.mxu0 0.0
        %1535 = vmatmul.mubr.f32.gmra.mxu0 %v1032
        %v1536 = vpop.f32.mrf.mxu0
        %v1537 = vadd.f32 0.0, %v1536
        %v1538 = vpop.f32.mrf.mxu0
        %1539 = vmatprep.mubr.f32.mxu0 0.0
        %1540 = vmatmul.mubr.f32.gmra.mxu0 %v1035
        %v1541 = vpop.f32.mrf.mxu0
        %v1542 = vadd.f32 0.0, %v1541
        %v1543 = vpop.f32.mrf.mxu0
        %1544 = vmatprep.mubr.f32.mxu0 0.0
        %1545 = vmatmul.mubr.f32.gmra.mxu0 %v1038
        %v1546 = vpop.f32.mrf.mxu0
        %v1547 = vadd.f32 0.0, %v1546
        %v1548 = vpop.f32.mrf.mxu0
        %1549 = vdwg.mxu0
        %1550 = vmatprep.subr.mxu0 0.0
        %1551 = vmatpush1.msra.mxu0 0.0
        %1552 = vmatprep.subr.mxu0 0.0
        %1553 = vmatpush1.msra.mxu0 0.0
        %1554 = vmatprep.subr.mxu0 0.0
        %1555 = vmatpush1.msra.mxu0 0.0
        %1556 = vmatprep.subr.mxu0 0.0
        %1557 = vmatpush1.msra.mxu0 0.0
        %1558 = vmatprep.subr.mxu0 0.0
        %1559 = vmatpush1.msra.mxu0 0.0
        %1560 = vmatprep.subr.mxu0 0.0
        %1561 = vmatpush1.msra.mxu0 0.0
        %1562 = vmatprep.subr.mxu0 0.0
        %1563 = vmatpush1.msra.mxu0 0.0
        %1564 = vmatprep.subr.mxu0 0.0
        %1565 = vmatpush1.msra.mxu0 0.0
        %1566 = vmatprep.subr.mxu0 0.0
        %1567 = vmatpush1.msra.mxu0 0.0
        %1568 = vmatprep.subr.mxu0 0.0
        %1569 = vmatpush1.msra.mxu0 0.0
        %1570 = vmatprep.subr.mxu0 0.0
        %1571 = vmatpush1.msra.mxu0 0.0
        %1572 = vmatprep.subr.mxu0 0.0
        %1573 = vmatpush1.msra.mxu0 0.0
        %1574 = vmatprep.subr.mxu0 0.0
        %1575 = vmatpush1.msra.mxu0 0.0
        %1576 = vmatprep.subr.mxu0 0.0
        %1577 = vmatpush1.msra.mxu0 0.0
        %1578 = vmatprep.subr.mxu0 0.0
        %1579 = vmatpush1.msra.mxu0 %v1020
        %1580 = vmatprep.subr.mxu0 0.0
        %1581 = vmatpush1.msra.mxu0 %v1019
        %1582 = vmatprep.subr.mxu0 0.0
        %1583 = vmatpush2.msra.mxu0 0.0
        %1584 = vmatprep.subr.mxu0 0.0
        %1585 = vmatpush2.msra.mxu0 0.0
        %1586 = vmatprep.subr.mxu0 0.0
        %1587 = vmatpush2.msra.mxu0 0.0
        %1588 = vmatprep.subr.mxu0 0.0
        %1589 = vmatpush2.msra.mxu0 0.0
        %1590 = vmatprep.subr.mxu0 0.0
        %1591 = vmatpush2.msra.mxu0 0.0
        %1592 = vmatprep.subr.mxu0 0.0
        %1593 = vmatpush2.msra.mxu0 0.0
        %1594 = vmatprep.subr.mxu0 0.0
        %1595 = vmatpush2.msra.mxu0 0.0
        %1596 = vmatprep.subr.mxu0 0.0
        %1597 = vmatpush2.msra.mxu0 0.0
        %1598 = vmatprep.subr.mxu0 0.0
        %1599 = vmatpush2.msra.mxu0 0.0
        %1600 = vmatprep.subr.mxu0 0.0
        %1601 = vmatpush2.msra.mxu0 0.0
        %1602 = vmatprep.subr.mxu0 0.0
        %1603 = vmatpush2.msra.mxu0 0.0
        %1604 = vmatprep.subr.mxu0 0.0
        %1605 = vmatpush2.msra.mxu0 0.0
        %1606 = vmatprep.subr.mxu0 0.0
        %1607 = vmatpush2.msra.mxu0 0.0
        %1608 = vmatprep.subr.mxu0 0.0
        %1609 = vmatpush2.msra.mxu0 0.0
        %1610 = vmatprep.subr.mxu0 0.0
        %1611 = vmatpush2.msra.mxu0 0.0
        %1612 = vmatprep.subr.mxu0 0.0
        %1613 = vmatpush2.msra.mxu0 0.0
        %1614 = vmatprep.mubr.f32.mxu0 0.0
        %1615 = vmatmul.mubr.f32.gmra.mxu0 %v1029
        %v1616 = vpop.f32.mrf.mxu0
        %v1617 = vadd.f32 0.0, %v1616
        %v1618 = vpop.f32.mrf.mxu0
        %1619 = vmatprep.mubr.f32.mxu0 0.0
        %1620 = vmatmul.mubr.f32.gmra.mxu0 %v1032
        %v1621 = vpop.f32.mrf.mxu0
        %v1622 = vadd.f32 0.0, %v1621
        %v1623 = vpop.f32.mrf.mxu0
        %1624 = vmatprep.mubr.f32.mxu0 0.0
        %1625 = vmatmul.mubr.f32.gmra.mxu0 %v1035
        %v1626 = vpop.f32.mrf.mxu0
        %v1627 = vadd.f32 0.0, %v1626
        %v1628 = vpop.f32.mrf.mxu0
        %1629 = vmatprep.mubr.f32.mxu0 0.0
        %1630 = vmatmul.mubr.f32.gmra.mxu0 %v1038
        %v1631 = vpop.f32.mrf.mxu0
        %v1632 = vadd.f32 0.0, %v1631
        %v1633 = vpop.f32.mrf.mxu0
        %1634 = vdwg.mxu0
        %1635 = vmatprep.subr.mxu0 0.0
        %1636 = vmatpush1.msra.mxu0 0.0
        %1637 = vmatprep.subr.mxu0 0.0
        %1638 = vmatpush1.msra.mxu0 0.0
        %1639 = vmatprep.subr.mxu0 0.0
        %1640 = vmatpush1.msra.mxu0 0.0
        %1641 = vmatprep.subr.mxu0 0.0
        %1642 = vmatpush1.msra.mxu0 0.0
        %1643 = vmatprep.subr.mxu0 0.0
        %1644 = vmatpush1.msra.mxu0 0.0
        %1645 = vmatprep.subr.mxu0 0.0
        %1646 = vmatpush1.msra.mxu0 0.0
        %1647 = vmatprep.subr.mxu0 0.0
        %1648 = vmatpush1.msra.mxu0 0.0
        %1649 = vmatprep.subr.mxu0 0.0
        %1650 = vmatpush1.msra.mxu0 0.0
        %1651 = vmatprep.subr.mxu0 0.0
        %1652 = vmatpush1.msra.mxu0 0.0
        %1653 = vmatprep.subr.mxu0 0.0
        %1654 = vmatpush1.msra.mxu0 0.0
        %1655 = vmatprep.subr.mxu0 0.0
        %1656 = vmatpush1.msra.mxu0 0.0
        %1657 = vmatprep.subr.mxu0 0.0
        %1658 = vmatpush1.msra.mxu0 0.0
        %1659 = vmatprep.subr.mxu0 0.0
        %1660 = vmatpush1.msra.mxu0 0.0
        %1661 = vmatprep.subr.mxu0 0.0
        %1662 = vmatpush1.msra.mxu0 0.0
        %1663 = vmatprep.subr.mxu0 0.0
        %1664 = vmatpush1.msra.mxu0 %v1022
        %1665 = vmatprep.subr.mxu0 0.0
        %1666 = vmatpush1.msra.mxu0 %v1021
        %1667 = vmatprep.subr.mxu0 0.0
        %1668 = vmatpush2.msra.mxu0 0.0
        %1669 = vmatprep.subr.mxu0 0.0
        %1670 = vmatpush2.msra.mxu0 0.0
        %1671 = vmatprep.subr.mxu0 0.0
        %1672 = vmatpush2.msra.mxu0 0.0
        %1673 = vmatprep.subr.mxu0 0.0
        %1674 = vmatpush2.msra.mxu0 0.0
        %1675 = vmatprep.subr.mxu0 0.0
        %1676 = vmatpush2.msra.mxu0 0.0
        %1677 = vmatprep.subr.mxu0 0.0
        %1678 = vmatpush2.msra.mxu0 0.0
        %1679 = vmatprep.subr.mxu0 0.0
        %1680 = vmatpush2.msra.mxu0 0.0
        %1681 = vmatprep.subr.mxu0 0.0
        %1682 = vmatpush2.msra.mxu0 0.0
        %1683 = vmatprep.subr.mxu0 0.0
        %1684 = vmatpush2.msra.mxu0 0.0
        %1685 = vmatprep.subr.mxu0 0.0
        %1686 = vmatpush2.msra.mxu0 0.0
        %1687 = vmatprep.subr.mxu0 0.0
        %1688 = vmatpush2.msra.mxu0 0.0
        %1689 = vmatprep.subr.mxu0 0.0
        %1690 = vmatpush2.msra.mxu0 0.0
        %1691 = vmatprep.subr.mxu0 0.0
        %1692 = vmatpush2.msra.mxu0 0.0
        %1693 = vmatprep.subr.mxu0 0.0
        %1694 = vmatpush2.msra.mxu0 0.0
        %1695 = vmatprep.subr.mxu0 0.0
        %1696 = vmatpush2.msra.mxu0 0.0
        %1697 = vmatprep.subr.mxu0 0.0
        %1698 = vmatpush2.msra.mxu0 0.0
        %1699 = vmatprep.mubr.f32.mxu0 0.0
        %1700 = vmatmul.mubr.f32.gmra.mxu0 %v1029
        %v1701 = vpop.f32.mrf.mxu0
        %v1702 = vadd.f32 0.0, %v1701
        %v1703 = vpop.f32.mrf.mxu0
        %1704 = vmatprep.mubr.f32.mxu0 0.0
        %1705 = vmatmul.mubr.f32.gmra.mxu0 %v1032
        %v1706 = vpop.f32.mrf.mxu0
        %v1707 = vadd.f32 0.0, %v1706
        %v1708 = vpop.f32.mrf.mxu0
        %1709 = vmatprep.mubr.f32.mxu0 0.0
        %1710 = vmatmul.mubr.f32.gmra.mxu0 %v1035
        %v1711 = vpop.f32.mrf.mxu0
        %v1712 = vadd.f32 0.0, %v1711
        %v1713 = vpop.f32.mrf.mxu0
        %1714 = vmatprep.mubr.f32.mxu0 0.0
        %1715 = vmatmul.mubr.f32.gmra.mxu0 %v1038
        %v1716 = vpop.f32.mrf.mxu0
        %v1717 = vadd.f32 0.0, %v1716
        %v1718 = vpop.f32.mrf.mxu0
        %1719 = vdwg.mxu0
        %v1720 = vld [vmem:[%s3] sm:$0xff]
        %v1721 = vld [vmem:[%s3 + $0x8] sm:$0xff]
        %v1723 = vsel %vm1027, %v1107, 0
        %v1726 = vsel %vm1027, %v1112, 0
        %v1729 = vsel %vm1027, %v1117, 0
        %v1732 = vsel %vm1027, %v1122, 0
        %1734 = vmatprep.subr.mxu0 0.0
        %1735 = vmatpush1.msra.mxu0 0.0
        %1736 = vmatprep.subr.mxu0 0.0
        %1737 = vmatpush1.msra.mxu0 0.0
        %1738 = vmatprep.subr.mxu0 0.0
        %1739 = vmatpush1.msra.mxu0 0.0
        %1740 = vmatprep.subr.mxu0 0.0
        %1741 = vmatpush1.msra.mxu0 0.0
        %1742 = vmatprep.subr.mxu0 0.0
        %1743 = vmatpush1.msra.mxu0 0.0
        %1744 = vmatprep.subr.mxu0 0.0
        %1745 = vmatpush1.msra.mxu0 0.0
        %1746 = vmatprep.subr.mxu0 0.0
        %1747 = vmatpush1.msra.mxu0 0.0
        %1748 = vmatprep.subr.mxu0 0.0
        %1749 = vmatpush1.msra.mxu0 0.0
        %1750 = vmatprep.subr.mxu0 0.0
        %1751 = vmatpush1.msra.mxu0 0.0
        %1752 = vmatprep.subr.mxu0 0.0
        %1753 = vmatpush1.msra.mxu0 0.0
        %1754 = vmatprep.subr.mxu0 0.0
        %1755 = vmatpush1.msra.mxu0 0.0
        %1756 = vmatprep.subr.mxu0 0.0
        %1757 = vmatpush1.msra.mxu0 0.0
        %1758 = vmatprep.subr.mxu0 0.0
        %1759 = vmatpush1.msra.mxu0 0.0
        %1760 = vmatprep.subr.mxu0 0.0
        %1761 = vmatpush1.msra.mxu0 0.0
        %1762 = vmatprep.subr.mxu0 0.0
        %1763 = vmatpush1.msra.mxu0 %v1721
        %1764 = vmatprep.subr.mxu0 0.0
        %1765 = vmatpush1.msra.mxu0 %v1720
        %1766 = vmatprep.subr.mxu0 0.0
        %1767 = vmatpush2.msra.mxu0 0.0
        %1768 = vmatprep.subr.mxu0 0.0
        %1769 = vmatpush2.msra.mxu0 0.0
        %1770 = vmatprep.subr.mxu0 0.0
        %1771 = vmatpush2.msra.mxu0 0.0
        %1772 = vmatprep.subr.mxu0 0.0
        %1773 = vmatpush2.msra.mxu0 0.0
        %1774 = vmatprep.subr.mxu0 0.0
        %1775 = vmatpush2.msra.mxu0 0.0
        %1776 = vmatprep.subr.mxu0 0.0
        %1777 = vmatpush2.msra.mxu0 0.0
        %1778 = vmatprep.subr.mxu0 0.0
        %1779 = vmatpush2.msra.mxu0 0.0
        %1780 = vmatprep.subr.mxu0 0.0
        %1781 = vmatpush2.msra.mxu0 0.0
        %1782 = vmatprep.subr.mxu0 0.0
        %1783 = vmatpush2.msra.mxu0 0.0
        %1784 = vmatprep.subr.mxu0 0.0
        %1785 = vmatpush2.msra.mxu0 0.0
        %1786 = vmatprep.subr.mxu0 0.0
        %1787 = vmatpush2.msra.mxu0 0.0
        %1788 = vmatprep.subr.mxu0 0.0
        %1789 = vmatpush2.msra.mxu0 0.0
        %1790 = vmatprep.subr.mxu0 0.0
        %1791 = vmatpush2.msra.mxu0 0.0
        %1792 = vmatprep.subr.mxu0 0.0
        %1793 = vmatpush2.msra.mxu0 0.0
        %1794 = vmatprep.subr.mxu0 0.0
        %1795 = vmatpush2.msra.mxu0 0.0
        %1796 = vmatprep.subr.mxu0 0.0
        %1797 = vmatpush2.msra.mxu0 0.0
        %1798 = vmatprep.mubr.f32.mxu0 0.0
        %1799 = vmatmul.mubr.f32.gmra.mxu0 %v1723
        %v1800 = vpop.f32.mrf.mxu0
        %v1801 = vadd.f32 0.0, %v1800
        %v1802 = vpop.f32.mrf.mxu0
        %1803 = vmatprep.mubr.f32.mxu0 0.0
        %1804 = vmatmul.mubr.f32.gmra.mxu0 %v1726
        %v1805 = vpop.f32.mrf.mxu0
        %v1806 = vadd.f32 0.0, %v1805
        %v1807 = vpop.f32.mrf.mxu0
        %1808 = vmatprep.mubr.f32.mxu0 0.0
        %1809 = vmatmul.mubr.f32.gmra.mxu0 %v1729
        %v1810 = vpop.f32.mrf.mxu0
        %v1811 = vadd.f32 0.0, %v1810
        %v1812 = vpop.f32.mrf.mxu0
        %1813 = vmatprep.mubr.f32.mxu0 0.0
        %1814 = vmatmul.mubr.f32.gmra.mxu0 %v1732
        %v1815 = vpop.f32.mrf.mxu0
        %v1816 = vadd.f32 0.0, %v1815
        %v1817 = vpop.f32.mrf.mxu0
        %1818 = vdwg.mxu0
        %v1820 = vsel %vm1027, %v1192, 0
        %v1823 = vsel %vm1027, %v1197, 0
        %v1826 = vsel %vm1027, %v1202, 0
        %v1829 = vsel %vm1027, %v1207, 0
        %1831 = vmatprep.subr.mxu0 0.0
        %1832 = vmatpush1.msra.mxu0 0.0
        %1833 = vmatprep.subr.mxu0 0.0
        %1834 = vmatpush1.msra.mxu0 0.0
        %1835 = vmatprep.subr.mxu0 0.0
        %1836 = vmatpush1.msra.mxu0 0.0
        %1837 = vmatprep.subr.mxu0 0.0
        %1838 = vmatpush1.msra.mxu0 0.0
        %1839 = vmatprep.subr.mxu0 0.0
        %1840 = vmatpush1.msra.mxu0 0.0
        %1841 = vmatprep.subr.mxu0 0.0
        %1842 = vmatpush1.msra.mxu0 0.0
        %1843 = vmatprep.subr.mxu0 0.0
        %1844 = vmatpush1.msra.mxu0 0.0
        %1845 = vmatprep.subr.mxu0 0.0
        %1846 = vmatpush1.msra.mxu0 0.0
        %1847 = vmatprep.subr.mxu0 0.0
        %1848 = vmatpush1.msra.mxu0 0.0
        %1849 = vmatprep.subr.mxu0 0.0
        %1850 = vmatpush1.msra.mxu0 0.0
        %1851 = vmatprep.subr.mxu0 0.0
        %1852 = vmatpush1.msra.mxu0 0.0
        %1853 = vmatprep.subr.mxu0 0.0
        %1854 = vmatpush1.msra.mxu0 0.0
        %1855 = vmatprep.subr.mxu0 0.0
        %1856 = vmatpush1.msra.mxu0 0.0
        %1857 = vmatprep.subr.mxu0 0.0
        %1858 = vmatpush1.msra.mxu0 0.0
        %1859 = vmatprep.subr.mxu0 0.0
        %1860 = vmatpush1.msra.mxu0 %v1721
        %1861 = vmatprep.subr.mxu0 0.0
        %1862 = vmatpush1.msra.mxu0 %v1720
        %1863 = vmatprep.subr.mxu0 0.0
        %1864 = vmatpush2.msra.mxu0 0.0
        %1865 = vmatprep.subr.mxu0 0.0
        %1866 = vmatpush2.msra.mxu0 0.0
        %1867 = vmatprep.subr.mxu0 0.0
        %1868 = vmatpush2.msra.mxu0 0.0
        %1869 = vmatprep.subr.mxu0 0.0
        %1870 = vmatpush2.msra.mxu0 0.0
        %1871 = vmatprep.subr.mxu0 0.0
        %1872 = vmatpush2.msra.mxu0 0.0
        %1873 = vmatprep.subr.mxu0 0.0
        %1874 = vmatpush2.msra.mxu0 0.0
        %1875 = vmatprep.subr.mxu0 0.0
        %1876 = vmatpush2.msra.mxu0 0.0
        %1877 = vmatprep.subr.mxu0 0.0
        %1878 = vmatpush2.msra.mxu0 0.0
        %1879 = vmatprep.subr.mxu0 0.0
        %1880 = vmatpush2.msra.mxu0 0.0
        %1881 = vmatprep.subr.mxu0 0.0
        %1882 = vmatpush2.msra.mxu0 0.0
        %1883 = vmatprep.subr.mxu0 0.0
        %1884 = vmatpush2.msra.mxu0 0.0
        %1885 = vmatprep.subr.mxu0 0.0
        %1886 = vmatpush2.msra.mxu0 0.0
        %1887 = vmatprep.subr.mxu0 0.0
        %1888 = vmatpush2.msra.mxu0 0.0
        %1889 = vmatprep.subr.mxu0 0.0
        %1890 = vmatpush2.msra.mxu0 0.0
        %1891 = vmatprep.subr.mxu0 0.0
        %1892 = vmatpush2.msra.mxu0 0.0
        %1893 = vmatprep.subr.mxu0 0.0
        %1894 = vmatpush2.msra.mxu0 0.0
        %1895 = vmatprep.mubr.f32.mxu0 0.0
        %1896 = vmatmul.mubr.f32.gmra.mxu0 %v1820
        %v1897 = vpop.f32.mrf.mxu0
        %v1898 = vadd.f32 0.0, %v1897
        %v1899 = vpop.f32.mrf.mxu0
        %1900 = vmatprep.mubr.f32.mxu0 0.0
        %1901 = vmatmul.mubr.f32.gmra.mxu0 %v1823
        %v1902 = vpop.f32.mrf.mxu0
        %v1903 = vadd.f32 0.0, %v1902
        %v1904 = vpop.f32.mrf.mxu0
        %1905 = vmatprep.mubr.f32.mxu0 0.0
        %1906 = vmatmul.mubr.f32.gmra.mxu0 %v1826
        %v1907 = vpop.f32.mrf.mxu0
        %v1908 = vadd.f32 0.0, %v1907
        %v1909 = vpop.f32.mrf.mxu0
        %1910 = vmatprep.mubr.f32.mxu0 0.0
        %1911 = vmatmul.mubr.f32.gmra.mxu0 %v1829
        %v1912 = vpop.f32.mrf.mxu0
        %v1913 = vadd.f32 0.0, %v1912
        %v1914 = vpop.f32.mrf.mxu0
        %1915 = vdwg.mxu0
        %v1917 = vsel %vm1027, %v1277, 0
        %v1920 = vsel %vm1027, %v1282, 0
        %v1923 = vsel %vm1027, %v1287, 0
        %v1926 = vsel %vm1027, %v1292, 0
        %1928 = vmatprep.subr.mxu0 0.0
        %1929 = vmatpush1.msra.mxu0 0.0
        %1930 = vmatprep.subr.mxu0 0.0
        %1931 = vmatpush1.msra.mxu0 0.0
        %1932 = vmatprep.subr.mxu0 0.0
        %1933 = vmatpush1.msra.mxu0 0.0
        %1934 = vmatprep.subr.mxu0 0.0
        %1935 = vmatpush1.msra.mxu0 0.0
        %1936 = vmatprep.subr.mxu0 0.0
        %1937 = vmatpush1.msra.mxu0 0.0
        %1938 = vmatprep.subr.mxu0 0.0
        %1939 = vmatpush1.msra.mxu0 0.0
        %1940 = vmatprep.subr.mxu0 0.0
        %1941 = vmatpush1.msra.mxu0 0.0
        %1942 = vmatprep.subr.mxu0 0.0
        %1943 = vmatpush1.msra.mxu0 0.0
        %1944 = vmatprep.subr.mxu0 0.0
        %1945 = vmatpush1.msra.mxu0 0.0
        %1946 = vmatprep.subr.mxu0 0.0
        %1947 = vmatpush1.msra.mxu0 0.0
        %1948 = vmatprep.subr.mxu0 0.0
        %1949 = vmatpush1.msra.mxu0 0.0
        %1950 = vmatprep.subr.mxu0 0.0
        %1951 = vmatpush1.msra.mxu0 0.0
        %1952 = vmatprep.subr.mxu0 0.0
        %1953 = vmatpush1.msra.mxu0 0.0
        %1954 = vmatprep.subr.mxu0 0.0
        %1955 = vmatpush1.msra.mxu0 0.0
        %1956 = vmatprep.subr.mxu0 0.0
        %1957 = vmatpush1.msra.mxu0 %v1721
        %1958 = vmatprep.subr.mxu0 0.0
        %1959 = vmatpush1.msra.mxu0 %v1720
        %1960 = vmatprep.subr.mxu0 0.0
        %1961 = vmatpush2.msra.mxu0 0.0
        %1962 = vmatprep.subr.mxu0 0.0
        %1963 = vmatpush2.msra.mxu0 0.0
        %1964 = vmatprep.subr.mxu0 0.0
        %1965 = vmatpush2.msra.mxu0 0.0
        %1966 = vmatprep.subr.mxu0 0.0
        %1967 = vmatpush2.msra.mxu0 0.0
        %1968 = vmatprep.subr.mxu0 0.0
        %1969 = vmatpush2.msra.mxu0 0.0
        %1970 = vmatprep.subr.mxu0 0.0
        %1971 = vmatpush2.msra.mxu0 0.0
        %1972 = vmatprep.subr.mxu0 0.0
        %1973 = vmatpush2.msra.mxu0 0.0
        %1974 = vmatprep.subr.mxu0 0.0
        %1975 = vmatpush2.msra.mxu0 0.0
        %1976 = vmatprep.subr.mxu0 0.0
        %1977 = vmatpush2.msra.mxu0 0.0
        %1978 = vmatprep.subr.mxu0 0.0
        %1979 = vmatpush2.msra.mxu0 0.0
        %1980 = vmatprep.subr.mxu0 0.0
        %1981 = vmatpush2.msra.mxu0 0.0
        %1982 = vmatprep.subr.mxu0 0.0
        %1983 = vmatpush2.msra.mxu0 0.0
        %1984 = vmatprep.subr.mxu0 0.0
        %1985 = vmatpush2.msra.mxu0 0.0
        %1986 = vmatprep.subr.mxu0 0.0
        %1987 = vmatpush2.msra.mxu0 0.0
        %1988 = vmatprep.subr.mxu0 0.0
        %1989 = vmatpush2.msra.mxu0 0.0
        %1990 = vmatprep.subr.mxu0 0.0
        %1991 = vmatpush2.msra.mxu0 0.0
        %1992 = vmatprep.mubr.f32.mxu0 0.0
        %1993 = vmatmul.mubr.f32.gmra.mxu0 %v1917
        %v1994 = vpop.f32.mrf.mxu0
        %v1995 = vadd.f32 0.0, %v1994
        %v1996 = vpop.f32.mrf.mxu0
        %1997 = vmatprep.mubr.f32.mxu0 0.0
        %1998 = vmatmul.mubr.f32.gmra.mxu0 %v1920
        %v1999 = vpop.f32.mrf.mxu0
        %v2000 = vadd.f32 0.0, %v1999
        %v2001 = vpop.f32.mrf.mxu0
        %2002 = vmatprep.mubr.f32.mxu0 0.0
        %2003 = vmatmul.mubr.f32.gmra.mxu0 %v1923
        %v2004 = vpop.f32.mrf.mxu0
        %v2005 = vadd.f32 0.0, %v2004
        %v2006 = vpop.f32.mrf.mxu0
        %2007 = vmatprep.mubr.f32.mxu0 0.0
        %2008 = vmatmul.mubr.f32.gmra.mxu0 %v1926
        %v2009 = vpop.f32.mrf.mxu0
        %v2010 = vadd.f32 0.0, %v2009
        %v2011 = vpop.f32.mrf.mxu0
        %2012 = vdwg.mxu0
        %v2014 = vsel %vm1027, %v1362, 0
        %v2017 = vsel %vm1027, %v1367, 0
        %v2020 = vsel %vm1027, %v1372, 0
        %v2023 = vsel %vm1027, %v1377, 0
        %2025 = vmatprep.subr.mxu0 0.0
        %2026 = vmatpush1.msra.mxu0 0.0
        %2027 = vmatprep.subr.mxu0 0.0
        %2028 = vmatpush1.msra.mxu0 0.0
        %2029 = vmatprep.subr.mxu0 0.0
        %2030 = vmatpush1.msra.mxu0 0.0
        %2031 = vmatprep.subr.mxu0 0.0
        %2032 = vmatpush1.msra.mxu0 0.0
        %2033 = vmatprep.subr.mxu0 0.0
        %2034 = vmatpush1.msra.mxu0 0.0
        %2035 = vmatprep.subr.mxu0 0.0
        %2036 = vmatpush1.msra.mxu0 0.0
        %2037 = vmatprep.subr.mxu0 0.0
        %2038 = vmatpush1.msra.mxu0 0.0
        %2039 = vmatprep.subr.mxu0 0.0
        %2040 = vmatpush1.msra.mxu0 0.0
        %2041 = vmatprep.subr.mxu0 0.0
        %2042 = vmatpush1.msra.mxu0 0.0
        %2043 = vmatprep.subr.mxu0 0.0
        %2044 = vmatpush1.msra.mxu0 0.0
        %2045 = vmatprep.subr.mxu0 0.0
        %2046 = vmatpush1.msra.mxu0 0.0
        %2047 = vmatprep.subr.mxu0 0.0
        %2048 = vmatpush1.msra.mxu0 0.0
        %2049 = vmatprep.subr.mxu0 0.0
        %2050 = vmatpush1.msra.mxu0 0.0
        %2051 = vmatprep.subr.mxu0 0.0
        %2052 = vmatpush1.msra.mxu0 0.0
        %2053 = vmatprep.subr.mxu0 0.0
        %2054 = vmatpush1.msra.mxu0 %v1721
        %2055 = vmatprep.subr.mxu0 0.0
        %2056 = vmatpush1.msra.mxu0 %v1720
        %2057 = vmatprep.subr.mxu0 0.0
        %2058 = vmatpush2.msra.mxu0 0.0
        %2059 = vmatprep.subr.mxu0 0.0
        %2060 = vmatpush2.msra.mxu0 0.0
        %2061 = vmatprep.subr.mxu0 0.0
        %2062 = vmatpush2.msra.mxu0 0.0
        %2063 = vmatprep.subr.mxu0 0.0
        %2064 = vmatpush2.msra.mxu0 0.0
        %2065 = vmatprep.subr.mxu0 0.0
        %2066 = vmatpush2.msra.mxu0 0.0
        %2067 = vmatprep.subr.mxu0 0.0
        %2068 = vmatpush2.msra.mxu0 0.0
        %2069 = vmatprep.subr.mxu0 0.0
        %2070 = vmatpush2.msra.mxu0 0.0
        %2071 = vmatprep.subr.mxu0 0.0
        %2072 = vmatpush2.msra.mxu0 0.0
        %2073 = vmatprep.subr.mxu0 0.0
        %2074 = vmatpush2.msra.mxu0 0.0
        %2075 = vmatprep.subr.mxu0 0.0
        %2076 = vmatpush2.msra.mxu0 0.0
        %2077 = vmatprep.subr.mxu0 0.0
        %2078 = vmatpush2.msra.mxu0 0.0
        %2079 = vmatprep.subr.mxu0 0.0
        %2080 = vmatpush2.msra.mxu0 0.0
        %2081 = vmatprep.subr.mxu0 0.0
        %2082 = vmatpush2.msra.mxu0 0.0
        %2083 = vmatprep.subr.mxu0 0.0
        %2084 = vmatpush2.msra.mxu0 0.0
        %2085 = vmatprep.subr.mxu0 0.0
        %2086 = vmatpush2.msra.mxu0 0.0
        %2087 = vmatprep.subr.mxu0 0.0
        %2088 = vmatpush2.msra.mxu0 0.0
        %2089 = vmatprep.mubr.f32.mxu0 0.0
        %2090 = vmatmul.mubr.f32.gmra.mxu0 %v2014
        %v2091 = vpop.f32.mrf.mxu0
        %v2092 = vadd.f32 0.0, %v2091
        %v2093 = vpop.f32.mrf.mxu0
        %2094 = vmatprep.mubr.f32.mxu0 0.0
        %2095 = vmatmul.mubr.f32.gmra.mxu0 %v2017
        %v2096 = vpop.f32.mrf.mxu0
        %v2097 = vadd.f32 0.0, %v2096
        %v2098 = vpop.f32.mrf.mxu0
        %2099 = vmatprep.mubr.f32.mxu0 0.0
        %2100 = vmatmul.mubr.f32.gmra.mxu0 %v2020
        %v2101 = vpop.f32.mrf.mxu0
        %v2102 = vadd.f32 0.0, %v2101
        %v2103 = vpop.f32.mrf.mxu0
        %2104 = vmatprep.mubr.f32.mxu0 0.0
        %2105 = vmatmul.mubr.f32.gmra.mxu0 %v2023
        %v2106 = vpop.f32.mrf.mxu0
        %v2107 = vadd.f32 0.0, %v2106
        %v2108 = vpop.f32.mrf.mxu0
        %2109 = vdwg.mxu0
        %v2111 = vsel %vm1027, %v1447, 0
        %v2114 = vsel %vm1027, %v1452, 0
        %v2117 = vsel %vm1027, %v1457, 0
        %v2120 = vsel %vm1027, %v1462, 0
        %2122 = vmatprep.subr.mxu0 0.0
        %2123 = vmatpush1.msra.mxu0 0.0
        %2124 = vmatprep.subr.mxu0 0.0
        %2125 = vmatpush1.msra.mxu0 0.0
        %2126 = vmatprep.subr.mxu0 0.0
        %2127 = vmatpush1.msra.mxu0 0.0
        %2128 = vmatprep.subr.mxu0 0.0
        %2129 = vmatpush1.msra.mxu0 0.0
        %2130 = vmatprep.subr.mxu0 0.0
        %2131 = vmatpush1.msra.mxu0 0.0
        %2132 = vmatprep.subr.mxu0 0.0
        %2133 = vmatpush1.msra.mxu0 0.0
        %2134 = vmatprep.subr.mxu0 0.0
        %2135 = vmatpush1.msra.mxu0 0.0
        %2136 = vmatprep.subr.mxu0 0.0
        %2137 = vmatpush1.msra.mxu0 0.0
        %2138 = vmatprep.subr.mxu0 0.0
        %2139 = vmatpush1.msra.mxu0 0.0
        %2140 = vmatprep.subr.mxu0 0.0
        %2141 = vmatpush1.msra.mxu0 0.0
        %2142 = vmatprep.subr.mxu0 0.0
        %2143 = vmatpush1.msra.mxu0 0.0
        %2144 = vmatprep.subr.mxu0 0.0
        %2145 = vmatpush1.msra.mxu0 0.0
        %2146 = vmatprep.subr.mxu0 0.0
        %2147 = vmatpush1.msra.mxu0 0.0
        %2148 = vmatprep.subr.mxu0 0.0
        %2149 = vmatpush1.msra.mxu0 0.0
        %2150 = vmatprep.subr.mxu0 0.0
        %2151 = vmatpush1.msra.mxu0 %v1721
        %2152 = vmatprep.subr.mxu0 0.0
        %2153 = vmatpush1.msra.mxu0 %v1720
        %2154 = vmatprep.subr.mxu0 0.0
        %2155 = vmatpush2.msra.mxu0 0.0
        %2156 = vmatprep.subr.mxu0 0.0
        %2157 = vmatpush2.msra.mxu0 0.0
        %2158 = vmatprep.subr.mxu0 0.0
        %2159 = vmatpush2.msra.mxu0 0.0
        %2160 = vmatprep.subr.mxu0 0.0
        %2161 = vmatpush2.msra.mxu0 0.0
        %2162 = vmatprep.subr.mxu0 0.0
        %2163 = vmatpush2.msra.mxu0 0.0
        %2164 = vmatprep.subr.mxu0 0.0
        %2165 = vmatpush2.msra.mxu0 0.0
        %2166 = vmatprep.subr.mxu0 0.0
        %2167 = vmatpush2.msra.mxu0 0.0
        %2168 = vmatprep.subr.mxu0 0.0
        %2169 = vmatpush2.msra.mxu0 0.0
        %2170 = vmatprep.subr.mxu0 0.0
        %2171 = vmatpush2.msra.mxu0 0.0
        %2172 = vmatprep.subr.mxu0 0.0
        %2173 = vmatpush2.msra.mxu0 0.0
        %2174 = vmatprep.subr.mxu0 0.0
        %2175 = vmatpush2.msra.mxu0 0.0
        %2176 = vmatprep.subr.mxu0 0.0
        %2177 = vmatpush2.msra.mxu0 0.0
        %2178 = vmatprep.subr.mxu0 0.0
        %2179 = vmatpush2.msra.mxu0 0.0
        %2180 = vmatprep.subr.mxu0 0.0
        %2181 = vmatpush2.msra.mxu0 0.0
        %2182 = vmatprep.subr.mxu0 0.0
        %2183 = vmatpush2.msra.mxu0 0.0
        %2184 = vmatprep.subr.mxu0 0.0
        %2185 = vmatpush2.msra.mxu0 0.0
        %2186 = vmatprep.mubr.f32.mxu0 0.0
        %2187 = vmatmul.mubr.f32.gmra.mxu0 %v2111
        %v2188 = vpop.f32.mrf.mxu0
        %v2189 = vadd.f32 0.0, %v2188
        %v2190 = vpop.f32.mrf.mxu0
        %2191 = vmatprep.mubr.f32.mxu0 0.0
        %2192 = vmatmul.mubr.f32.gmra.mxu0 %v2114
        %v2193 = vpop.f32.mrf.mxu0
        %v2194 = vadd.f32 0.0, %v2193
        %v2195 = vpop.f32.mrf.mxu0
        %2196 = vmatprep.mubr.f32.mxu0 0.0
        %2197 = vmatmul.mubr.f32.gmra.mxu0 %v2117
        %v2198 = vpop.f32.mrf.mxu0
        %v2199 = vadd.f32 0.0, %v2198
        %v2200 = vpop.f32.mrf.mxu0
        %2201 = vmatprep.mubr.f32.mxu0 0.0
        %2202 = vmatmul.mubr.f32.gmra.mxu0 %v2120
        %v2203 = vpop.f32.mrf.mxu0
        %v2204 = vadd.f32 0.0, %v2203
        %v2205 = vpop.f32.mrf.mxu0
        %2206 = vdwg.mxu0
        %v2208 = vsel %vm1027, %v1532, 0
        %v2211 = vsel %vm1027, %v1537, 0
        %v2214 = vsel %vm1027, %v1542, 0
        %v2217 = vsel %vm1027, %v1547, 0
        %2219 = vmatprep.subr.mxu0 0.0
        %2220 = vmatpush1.msra.mxu0 0.0
        %2221 = vmatprep.subr.mxu0 0.0
        %2222 = vmatpush1.msra.mxu0 0.0
        %2223 = vmatprep.subr.mxu0 0.0
        %2224 = vmatpush1.msra.mxu0 0.0
        %2225 = vmatprep.subr.mxu0 0.0
        %2226 = vmatpush1.msra.mxu0 0.0
        %2227 = vmatprep.subr.mxu0 0.0
        %2228 = vmatpush1.msra.mxu0 0.0
        %2229 = vmatprep.subr.mxu0 0.0
        %2230 = vmatpush1.msra.mxu0 0.0
        %2231 = vmatprep.subr.mxu0 0.0
        %2232 = vmatpush1.msra.mxu0 0.0
        %2233 = vmatprep.subr.mxu0 0.0
        %2234 = vmatpush1.msra.mxu0 0.0
        %2235 = vmatprep.subr.mxu0 0.0
        %2236 = vmatpush1.msra.mxu0 0.0
        %2237 = vmatprep.subr.mxu0 0.0
        %2238 = vmatpush1.msra.mxu0 0.0
        %2239 = vmatprep.subr.mxu0 0.0
        %2240 = vmatpush1.msra.mxu0 0.0
        %2241 = vmatprep.subr.mxu0 0.0
        %2242 = vmatpush1.msra.mxu0 0.0
        %2243 = vmatprep.subr.mxu0 0.0
        %2244 = vmatpush1.msra.mxu0 0.0
        %2245 = vmatprep.subr.mxu0 0.0
        %2246 = vmatpush1.msra.mxu0 0.0
        %2247 = vmatprep.subr.mxu0 0.0
        %2248 = vmatpush1.msra.mxu0 %v1721
        %2249 = vmatprep.subr.mxu0 0.0
        %2250 = vmatpush1.msra.mxu0 %v1720
        %2251 = vmatprep.subr.mxu0 0.0
        %2252 = vmatpush2.msra.mxu0 0.0
        %2253 = vmatprep.subr.mxu0 0.0
        %2254 = vmatpush2.msra.mxu0 0.0
        %2255 = vmatprep.subr.mxu0 0.0
        %2256 = vmatpush2.msra.mxu0 0.0
        %2257 = vmatprep.subr.mxu0 0.0
        %2258 = vmatpush2.msra.mxu0 0.0
        %2259 = vmatprep.subr.mxu0 0.0
        %2260 = vmatpush2.msra.mxu0 0.0
        %2261 = vmatprep.subr.mxu0 0.0
        %2262 = vmatpush2.msra.mxu0 0.0
        %2263 = vmatprep.subr.mxu0 0.0
        %2264 = vmatpush2.msra.mxu0 0.0
        %2265 = vmatprep.subr.mxu0 0.0
        %2266 = vmatpush2.msra.mxu0 0.0
        %2267 = vmatprep.subr.mxu0 0.0
        %2268 = vmatpush2.msra.mxu0 0.0
        %2269 = vmatprep.subr.mxu0 0.0
        %2270 = vmatpush2.msra.mxu0 0.0
        %2271 = vmatprep.subr.mxu0 0.0
        %2272 = vmatpush2.msra.mxu0 0.0
        %2273 = vmatprep.subr.mxu0 0.0
        %2274 = vmatpush2.msra.mxu0 0.0
        %2275 = vmatprep.subr.mxu0 0.0
        %2276 = vmatpush2.msra.mxu0 0.0
        %2277 = vmatprep.subr.mxu0 0.0
        %2278 = vmatpush2.msra.mxu0 0.0
        %2279 = vmatprep.subr.mxu0 0.0
        %2280 = vmatpush2.msra.mxu0 0.0
        %2281 = vmatprep.subr.mxu0 0.0
        %2282 = vmatpush2.msra.mxu0 0.0
        %2283 = vmatprep.mubr.f32.mxu0 0.0
        %2284 = vmatmul.mubr.f32.gmra.mxu0 %v2208
        %v2285 = vpop.f32.mrf.mxu0
        %v2286 = vadd.f32 0.0, %v2285
        %v2287 = vpop.f32.mrf.mxu0
        %2288 = vmatprep.mubr.f32.mxu0 0.0
        %2289 = vmatmul.mubr.f32.gmra.mxu0 %v2211
        %v2290 = vpop.f32.mrf.mxu0
        %v2291 = vadd.f32 0.0, %v2290
        %v2292 = vpop.f32.mrf.mxu0
        %2293 = vmatprep.mubr.f32.mxu0 0.0
        %2294 = vmatmul.mubr.f32.gmra.mxu0 %v2214
        %v2295 = vpop.f32.mrf.mxu0
        %v2296 = vadd.f32 0.0, %v2295
        %v2297 = vpop.f32.mrf.mxu0
        %2298 = vmatprep.mubr.f32.mxu0 0.0
        %2299 = vmatmul.mubr.f32.gmra.mxu0 %v2217
        %v2300 = vpop.f32.mrf.mxu0
        %v2301 = vadd.f32 0.0, %v2300
        %v2302 = vpop.f32.mrf.mxu0
        %2303 = vdwg.mxu0
        %v2305 = vsel %vm1027, %v1617, 0
        %v2308 = vsel %vm1027, %v1622, 0
        %v2311 = vsel %vm1027, %v1627, 0
        %v2314 = vsel %vm1027, %v1632, 0
        %2316 = vmatprep.subr.mxu0 0.0
        %2317 = vmatpush1.msra.mxu0 0.0
        %2318 = vmatprep.subr.mxu0 0.0
        %2319 = vmatpush1.msra.mxu0 0.0
        %2320 = vmatprep.subr.mxu0 0.0
        %2321 = vmatpush1.msra.mxu0 0.0
        %2322 = vmatprep.subr.mxu0 0.0
        %2323 = vmatpush1.msra.mxu0 0.0
        %2324 = vmatprep.subr.mxu0 0.0
        %2325 = vmatpush1.msra.mxu0 0.0
        %2326 = vmatprep.subr.mxu0 0.0
        %2327 = vmatpush1.msra.mxu0 0.0
        %2328 = vmatprep.subr.mxu0 0.0
        %2329 = vmatpush1.msra.mxu0 0.0
        %2330 = vmatprep.subr.mxu0 0.0
        %2331 = vmatpush1.msra.mxu0 0.0
        %2332 = vmatprep.subr.mxu0 0.0
        %2333 = vmatpush1.msra.mxu0 0.0
        %2334 = vmatprep.subr.mxu0 0.0
        %2335 = vmatpush1.msra.mxu0 0.0
        %2336 = vmatprep.subr.mxu0 0.0
        %2337 = vmatpush1.msra.mxu0 0.0
        %2338 = vmatprep.subr.mxu0 0.0
        %2339 = vmatpush1.msra.mxu0 0.0
        %2340 = vmatprep.subr.mxu0 0.0
        %2341 = vmatpush1.msra.mxu0 0.0
        %2342 = vmatprep.subr.mxu0 0.0
        %2343 = vmatpush1.msra.mxu0 0.0
        %2344 = vmatprep.subr.mxu0 0.0
        %2345 = vmatpush1.msra.mxu0 %v1721
        %2346 = vmatprep.subr.mxu0 0.0
        %2347 = vmatpush1.msra.mxu0 %v1720
        %2348 = vmatprep.subr.mxu0 0.0
        %2349 = vmatpush2.msra.mxu0 0.0
        %2350 = vmatprep.subr.mxu0 0.0
        %2351 = vmatpush2.msra.mxu0 0.0
        %2352 = vmatprep.subr.mxu0 0.0
        %2353 = vmatpush2.msra.mxu0 0.0
        %2354 = vmatprep.subr.mxu0 0.0
        %2355 = vmatpush2.msra.mxu0 0.0
        %2356 = vmatprep.subr.mxu0 0.0
        %2357 = vmatpush2.msra.mxu0 0.0
        %2358 = vmatprep.subr.mxu0 0.0
        %2359 = vmatpush2.msra.mxu0 0.0
        %2360 = vmatprep.subr.mxu0 0.0
        %2361 = vmatpush2.msra.mxu0 0.0
        %2362 = vmatprep.subr.mxu0 0.0
        %2363 = vmatpush2.msra.mxu0 0.0
        %2364 = vmatprep.subr.mxu0 0.0
        %2365 = vmatpush2.msra.mxu0 0.0
        %2366 = vmatprep.subr.mxu0 0.0
        %2367 = vmatpush2.msra.mxu0 0.0
        %2368 = vmatprep.subr.mxu0 0.0
        %2369 = vmatpush2.msra.mxu0 0.0
        %2370 = vmatprep.subr.mxu0 0.0
        %2371 = vmatpush2.msra.mxu0 0.0
        %2372 = vmatprep.subr.mxu0 0.0
        %2373 = vmatpush2.msra.mxu0 0.0
        %2374 = vmatprep.subr.mxu0 0.0
        %2375 = vmatpush2.msra.mxu0 0.0
        %2376 = vmatprep.subr.mxu0 0.0
        %2377 = vmatpush2.msra.mxu0 0.0
        %2378 = vmatprep.subr.mxu0 0.0
        %2379 = vmatpush2.msra.mxu0 0.0
        %2380 = vmatprep.mubr.f32.mxu0 0.0
        %2381 = vmatmul.mubr.f32.gmra.mxu0 %v2305
        %v2382 = vpop.f32.mrf.mxu0
        %v2383 = vadd.f32 0.0, %v2382
        %v2384 = vpop.f32.mrf.mxu0
        %2385 = vmatprep.mubr.f32.mxu0 0.0
        %2386 = vmatmul.mubr.f32.gmra.mxu0 %v2308
        %v2387 = vpop.f32.mrf.mxu0
        %v2388 = vadd.f32 0.0, %v2387
        %v2389 = vpop.f32.mrf.mxu0
        %2390 = vmatprep.mubr.f32.mxu0 0.0
        %2391 = vmatmul.mubr.f32.gmra.mxu0 %v2311
        %v2392 = vpop.f32.mrf.mxu0
        %v2393 = vadd.f32 0.0, %v2392
        %v2394 = vpop.f32.mrf.mxu0
        %2395 = vmatprep.mubr.f32.mxu0 0.0
        %2396 = vmatmul.mubr.f32.gmra.mxu0 %v2314
        %v2397 = vpop.f32.mrf.mxu0
        %v2398 = vadd.f32 0.0, %v2397
        %v2399 = vpop.f32.mrf.mxu0
        %2400 = vdwg.mxu0
        %v2402 = vsel %vm1027, %v1702, 0
        %v2405 = vsel %vm1027, %v1707, 0
        %v2408 = vsel %vm1027, %v1712, 0
        %v2411 = vsel %vm1027, %v1717, 0
        %2413 = vmatprep.subr.mxu0 0.0
        %2414 = vmatpush1.msra.mxu0 0.0
        %2415 = vmatprep.subr.mxu0 0.0
        %2416 = vmatpush1.msra.mxu0 0.0
        %2417 = vmatprep.subr.mxu0 0.0
        %2418 = vmatpush1.msra.mxu0 0.0
        %2419 = vmatprep.subr.mxu0 0.0
        %2420 = vmatpush1.msra.mxu0 0.0
        %2421 = vmatprep.subr.mxu0 0.0
        %2422 = vmatpush1.msra.mxu0 0.0
        %2423 = vmatprep.subr.mxu0 0.0
        %2424 = vmatpush1.msra.mxu0 0.0
        %2425 = vmatprep.subr.mxu0 0.0
        %2426 = vmatpush1.msra.mxu0 0.0
        %2427 = vmatprep.subr.mxu0 0.0
        %2428 = vmatpush1.msra.mxu0 0.0
        %2429 = vmatprep.subr.mxu0 0.0
        %2430 = vmatpush1.msra.mxu0 0.0
        %2431 = vmatprep.subr.mxu0 0.0
        %2432 = vmatpush1.msra.mxu0 0.0
        %2433 = vmatprep.subr.mxu0 0.0
        %2434 = vmatpush1.msra.mxu0 0.0
        %2435 = vmatprep.subr.mxu0 0.0
        %2436 = vmatpush1.msra.mxu0 0.0
        %2437 = vmatprep.subr.mxu0 0.0
        %2438 = vmatpush1.msra.mxu0 0.0
        %2439 = vmatprep.subr.mxu0 0.0
        %2440 = vmatpush1.msra.mxu0 0.0
        %2441 = vmatprep.subr.mxu0 0.0
        %2442 = vmatpush1.msra.mxu0 %v1721
        %2443 = vmatprep.subr.mxu0 0.0
        %2444 = vmatpush1.msra.mxu0 %v1720
        %2445 = vmatprep.subr.mxu0 0.0
        %2446 = vmatpush2.msra.mxu0 0.0
        %2447 = vmatprep.subr.mxu0 0.0
        %2448 = vmatpush2.msra.mxu0 0.0
        %2449 = vmatprep.subr.mxu0 0.0
        %2450 = vmatpush2.msra.mxu0 0.0
        %2451 = vmatprep.subr.mxu0 0.0
        %2452 = vmatpush2.msra.mxu0 0.0
        %2453 = vmatprep.subr.mxu0 0.0
        %2454 = vmatpush2.msra.mxu0 0.0
        %2455 = vmatprep.subr.mxu0 0.0
        %2456 = vmatpush2.msra.mxu0 0.0
        %2457 = vmatprep.subr.mxu0 0.0
        %2458 = vmatpush2.msra.mxu0 0.0
        %2459 = vmatprep.subr.mxu0 0.0
        %2460 = vmatpush2.msra.mxu0 0.0
        %2461 = vmatprep.subr.mxu0 0.0
        %2462 = vmatpush2.msra.mxu0 0.0
        %2463 = vmatprep.subr.mxu0 0.0
        %2464 = vmatpush2.msra.mxu0 0.0
        %2465 = vmatprep.subr.mxu0 0.0
        %2466 = vmatpush2.msra.mxu0 0.0
        %2467 = vmatprep.subr.mxu0 0.0
        %2468 = vmatpush2.msra.mxu0 0.0
        %2469 = vmatprep.subr.mxu0 0.0
        %2470 = vmatpush2.msra.mxu0 0.0
        %2471 = vmatprep.subr.mxu0 0.0
        %2472 = vmatpush2.msra.mxu0 0.0
        %2473 = vmatprep.subr.mxu0 0.0
        %2474 = vmatpush2.msra.mxu0 0.0
        %2475 = vmatprep.subr.mxu0 0.0
        %2476 = vmatpush2.msra.mxu0 0.0
        %2477 = vmatprep.mubr.f32.mxu0 0.0
        %2478 = vmatmul.mubr.f32.gmra.mxu0 %v2402
        %v2479 = vpop.f32.mrf.mxu0
        %v2480 = vadd.f32 0.0, %v2479
        %v2481 = vpop.f32.mrf.mxu0
        %2482 = vmatprep.mubr.f32.mxu0 0.0
        %2483 = vmatmul.mubr.f32.gmra.mxu0 %v2405
        %v2484 = vpop.f32.mrf.mxu0
        %v2485 = vadd.f32 0.0, %v2484
        %v2486 = vpop.f32.mrf.mxu0
        %2487 = vmatprep.mubr.f32.mxu0 0.0
        %2488 = vmatmul.mubr.f32.gmra.mxu0 %v2408
        %v2489 = vpop.f32.mrf.mxu0
        %v2490 = vadd.f32 0.0, %v2489
        %v2491 = vpop.f32.mrf.mxu0
        %2492 = vmatprep.mubr.f32.mxu0 0.0
        %2493 = vmatmul.mubr.f32.gmra.mxu0 %v2411
        %v2494 = vpop.f32.mrf.mxu0
        %v2495 = vadd.f32 0.0, %v2494
        %v2496 = vpop.f32.mrf.mxu0
        %2497 = vdwg.mxu0
        %vm2498 = vcmask 261120
        %2499 = vst.msk [vmem:[%s257] sm:$0xff] %vm2498, %v1801
        %2500 = vst.msk [vmem:[%s257 + $0x8] sm:$0xff] %vm2498, %v1806
        %2501 = vst.msk [vmem:[%s257 + $0x10] sm:$0xff] %vm2498, %v1811
        %2502 = vst.msk [vmem:[%s257 + $0x18] sm:$0xff] %vm2498, %v1816
        %2503 = vst.msk [vmem:[%s257 + $0x20] sm:$0xff] %vm2498, %v1898
        %2504 = vst.msk [vmem:[%s257 + $0x28] sm:$0xff] %vm2498, %v1903
        %2505 = vst.msk [vmem:[%s257 + $0x30] sm:$0xff] %vm2498, %v1908
        %2506 = vst.msk [vmem:[%s257 + $0x38] sm:$0xff] %vm2498, %v1913
        %2507 = vst.msk [vmem:[%s257 + $0x40] sm:$0xff] %vm2498, %v1995
        %2508 = vst.msk [vmem:[%s257 + $0x48] sm:$0xff] %vm2498, %v2000
        %2509 = vst.msk [vmem:[%s257 + $0x50] sm:$0xff] %vm2498, %v2005
        %2510 = vst.msk [vmem:[%s257 + $0x58] sm:$0xff] %vm2498, %v2010
        %2511 = vst.msk [vmem:[%s257 + $0x60] sm:$0xff] %vm2498, %v2092
        %2512 = vst.msk [vmem:[%s257 + $0x68] sm:$0xff] %vm2498, %v2097
        %2513 = vst.msk [vmem:[%s257 + $0x70] sm:$0xff] %vm2498, %v2102
        %2514 = vst.msk [vmem:[%s257 + $0x78] sm:$0xff] %vm2498, %v2107
        %2515 = vst.msk [vmem:[%s257 + $0x80] sm:$0xff] %vm2498, %v2189
        %2516 = vst.msk [vmem:[%s257 + $0x88] sm:$0xff] %vm2498, %v2194
        %2517 = vst.msk [vmem:[%s257 + $0x90] sm:$0xff] %vm2498, %v2199
        %2518 = vst.msk [vmem:[%s257 + $0x98] sm:$0xff] %vm2498, %v2204
        %2519 = vst.msk [vmem:[%s257 + $0xa0] sm:$0xff] %vm2498, %v2286
        %2520 = vst.msk [vmem:[%s257 + $0xa8] sm:$0xff] %vm2498, %v2291
        %2521 = vst.msk [vmem:[%s257 + $0xb0] sm:$0xff] %vm2498, %v2296
        %2522 = vst.msk [vmem:[%s257 + $0xb8] sm:$0xff] %vm2498, %v2301
        %2523 = vst.msk [vmem:[%s257 + $0xc0] sm:$0xff] %vm2498, %v2383
        %2524 = vst.msk [vmem:[%s257 + $0xc8] sm:$0xff] %vm2498, %v2388
        %2525 = vst.msk [vmem:[%s257 + $0xd0] sm:$0xff] %vm2498, %v2393
        %2526 = vst.msk [vmem:[%s257 + $0xd8] sm:$0xff] %vm2498, %v2398
        %2527 = vst.msk [vmem:[%s257 + $0xe0] sm:$0xff] %vm2498, %v2480
        %2528 = vst.msk [vmem:[%s257 + $0xe8] sm:$0xff] %vm2498, %v2485
        %2529 = vst.msk [vmem:[%s257 + $0xf0] sm:$0xff] %vm2498, %v2490
        %2530 = vst.msk [vmem:[%s257 + $0xf8] sm:$0xff] %vm2498, %v2495
        %s2531 = sand.u32 %s161, 1
        %s2532 = scalar_lea.sflag [#allocation4], %s2531
        %s2533 = sand.u32 %s161, 1
        %s2534 = smul.addr %s2533, 256
        %s2535 = scalar_lea.vmem [#allocation3], %s2534
        // Predicated region
        $region41: #{tpu_custom_call.1} parent=39 // pred_check
          %p2536 = pneg %p171
        $region42: #{tpu_custom_call.1} parent=39 // pred_check_branch
          %2538 = sbr.rel (%p2536) target = $region44
        $region43: #{tpu_custom_call.1} parent=39 // pred_region
          %s2539 = smul.u32 8, %s24
          %s2541 = ssub.s32 4096, 4096
          %2542 = vsyncadd %s2532, %s2541
          %s2543 = smul.addr %s2539, 4
          %s2544 = smul.addr %s23, 32
          %s2545 = sadd.s32 %s2543, %s2544
          %s2546 = smul.addr %s2545, 128
          %s2547 = scalar_lea.hbm %s5, %s2546
          %s2548 = sshll.u32 %s2535, 4
          %s2549 = int_to_ptr.vmem [resolvable:$true] %s2548
          %2554 = dma.vmem_to_hbm [thread:$0]  %s2549, 4096, %s2547, %s2532, 128, 128, 8
        $region44: #{tpu_custom_call.1} parent=39 // pred_fallthru
          _
      $region40: #{tpu_custom_call.1} parent=5 // pred_fallthru
        _
      %p2555 = scmp.le.s32.totalorder 2, %s14
      // Predicated region
      $region45: #{tpu_custom_call.1} parent=5 // pred_check
        %p2556 = pneg %p2555
      $region46: #{tpu_custom_call.1} parent=5 // pred_check_branch
        %2558 = sbr.rel (%p2556) target = $region48
      $region47: #{tpu_custom_call.1} parent=5 // pred_region
        %s2559 = ssub.s32 %s14, 2
        // Predicated region
        $region49: #{tpu_custom_call.1} parent=47 // pred_check
          %p2560 = pneg %p177
        $region50: #{tpu_custom_call.1} parent=47 // pred_check_branch
          %2562 = sbr.rel (%p2560) target = $region52
        $region51: #{tpu_custom_call.1} parent=47 // pred_region
          %s2563 = sand.u32 %s162, 1
          %s2564 = scalar_lea.sflag [#allocation4], %s2563
          %s2565 = sand.u32 %s162, 1
          %s2566 = smul.addr %s2565, 256
          %s2567 = scalar_lea.vmem [#allocation3], %s2566
          %2568 = dma.done %s2564, 4096
        $region52: #{tpu_custom_call.1} parent=47 // pred_fallthru
          _
      $region48: #{tpu_custom_call.1} parent=5 // pred_fallthru
        _
    $region6: #{tpu_custom_call.1} parent=1 // loop_footer
      %s18 = sadd.s32 1, %s14
    $region7: #{tpu_custom_call.1} parent=1 // loop_footer_branch
      %13 = sbr.rel target = $region3
    $region8: #{tpu_custom_call.1} parent=1 // loop_exit
      _
    %2569 = vsyncpa [#allocation4], 1
    %s2570 = scalar_lea.sflag [#allocation4], 1
    %2571 = vsyncpa %s2570, 1

</llo_original>
